<compile_context>
chip_gen: v7x
topology: tpu7x:2x2x1
jax: 0.10.0
libtpu: 0.0.40
codegen_flags: <defaults>
</compile_context>

<pallas_src>
import functools

import jax
import jax.numpy as jnp
from jax.experimental import pallas as pl
from jax.experimental.pallas import tpu as pltpu


HIDDEN1 = 512          # layer1 output features
OUT_DIM = 28 * 28      # 784, layer2 output features
OUT_PAD = 896          # 784 rounded up to 7 * 128 (lane-dense stores)


def _round_up(x, m):
    return ((x + m - 1) // m) * m


def decoder_kernel(x_ref, w1_ref, b1_ref, w2_ref, b2_ref, y_ref):
    # layer1: cast x to bf16 in-kernel (hidden under MXU), accumulate in f32.
    h = jnp.dot(x_ref[...].astype(jnp.bfloat16), w1_ref[...],
                preferred_element_type=jnp.float32)
    # bias add in f32, then a single bf16 copy of h for the layer-2 MXU pass.
    h = (h + b1_ref[...]).astype(jnp.bfloat16)
    # layer2: bf16 inputs, f32 accumulation, f32 bias add, store f32.
    y = jnp.dot(h, w2_ref[...], preferred_element_type=jnp.float32)
    y_ref[...] = (y + b2_ref[...]).astype(y_ref.dtype)


@functools.partial(jax.jit, static_argnames=("block_m",))
def decoder_forward(x, w1t, b1, w2t, b2, *, block_m=512):
    """Fused decoder forward.

    x:   (B, H)        float32 (cast to bf16 inside the kernel)
    w1t: (H, 512)      bfloat16, pre-transposed & cached at init
    b1:  (1, 512)      float32
    w2t: (512, 896)    bfloat16, pre-transposed, zero-padded 784 -> 896
    b2:  (1, 896)      float32, zero-padded 784 -> 896
    returns (B, 784)   float32
    """
    B, H = x.shape
    n_pad = w2t.shape[1]                      # 896

    # Batch tile: cap at block_m, round small batches up to a multiple of 8
    # (sublane rule).  Pad B to a multiple of tm so every grid step is full.
    tm = min(block_m, _round_up(B, 8))
    b_pad = _round_up(B, tm)
    if b_pad != B:
        x = jnp.pad(x, ((0, b_pad - B), (0, 0)))
    grid = (b_pad // tm,)

    # Scoped-VMEM budget: double-buffered x & y tiles, resident weights/biases,
    # f32 + bf16 intermediate h; 2x headroom, clamped to [32 MiB, 48 MiB]
    # (48 MiB stays under v7x's 64 MiB physical VMEM per TensorCore).
    est = (2 * tm * H * 4                      # x tiles (f32, double-buffered)
           + 2 * tm * n_pad * 4                # y tiles (f32, double-buffered)
           + 2 * (H * HIDDEN1 * 2 + HIDDEN1 * 4)        # w1t + b1
           + 2 * (HIDDEN1 * n_pad * 2 + n_pad * 4)      # w2t + b2
           + tm * HIDDEN1 * 6)                 # h in f32 + bf16
    vmem_limit = min(max(2 * est, 32 * 1024 * 1024), 48 * 1024 * 1024)

    y = pl.pallas_call(
        decoder_kernel,
        out_shape=jax.ShapeDtypeStruct((b_pad, n_pad), jnp.float32),
        grid=grid,
        in_specs=[
            pl.BlockSpec((tm, H), lambda i: (i, 0)),             # x tile
            pl.BlockSpec((H, HIDDEN1), lambda i: (0, 0)),        # w1t resident
            pl.BlockSpec((1, HIDDEN1), lambda i: (0, 0)),        # b1 resident
            pl.BlockSpec((HIDDEN1, n_pad), lambda i: (0, 0)),    # w2t resident
            pl.BlockSpec((1, n_pad), lambda i: (0, 0)),          # b2 resident
        ],
        out_specs=pl.BlockSpec((tm, n_pad), lambda i: (i, 0)),
        compiler_params=pltpu.CompilerParams(
            dimension_semantics=("parallel",),
            vmem_limit_bytes=vmem_limit,
        ),
    )(x, w1t, b1, w2t, b2)

    # Strip batch padding and the lane padding of the output dimension.
    return y[:B, :OUT_DIM]


def init_linear_params(key, out_features, in_features):
    """Deterministic init matching PyTorch nn.Linear default:
    U(-1/sqrt(fan_in), 1/sqrt(fan_in)) for weight (out, in) and bias (out,)."""
    kw, kb = jax.random.split(key)
    bound = 1.0 / jnp.sqrt(jnp.float32(in_features))
    w = jax.random.uniform(kw, (out_features, in_features), jnp.float32, -bound, bound)
    b = jax.random.uniform(kb, (out_features,), jnp.float32, -bound, bound)
    return w, b


def prepare_decoder_params(w1, b1, w2, b2):
    """One-time (init-time) caching of kernel-layout params:
    transpose to (in, out), cast weights to bf16, reshape biases to (1, out),
    and zero-pad the layer-2 output dim 784 -> 896 for lane-dense stores."""
    w1t = jnp.transpose(w1).astype(jnp.bfloat16)                    # (H, 512)
    w2t = jnp.transpose(w2).astype(jnp.bfloat16)                    # (512, 784)
    w2t = jnp.pad(w2t, ((0, 0), (0, OUT_PAD - OUT_DIM)))            # (512, 896)
    b1r = b1.reshape(1, -1).astype(jnp.float32)                     # (1, 512)
    b2r = b2.reshape(1, -1).astype(jnp.float32)                     # (1, 784)
    b2r = jnp.pad(b2r, ((0, 0), (0, OUT_PAD - OUT_DIM)))            # (1, 896)
    return w1t, b1r, w2t, b2r


if __name__ == "__main__":
    hidden_dim = 32
    B = 8

    key = jax.random.PRNGKey(0)
    k_x, k_l1, k_l2 = jax.random.split(key, 3)

    # latent code input: (B, hidden_dim)
    x = jax.random.normal(k_x, (B, hidden_dim), jnp.float32)

    # PyTorch-style params (out, in), then cache kernel layout once.
    w1, b1 = init_linear_params(k_l1, HIDDEN1, hidden_dim)      # layer1: H -> 512
    w2, b2 = init_linear_params(k_l2, OUT_DIM, HIDDEN1)         # layer2: 512 -> 784
    w1t, b1r, w2t, b2r = prepare_decoder_params(w1, b1, w2, b2)

    y = decoder_forward(x, w1t, b1r, w2t, b2r)
    y = jax.block_until_ready(y)

    # Reference check in plain f32 JAX (same math as the PyTorch forward).
    y_ref = (x @ w1.T + b1) @ w2.T + b2
    assert y.shape == (B, OUT_DIM)
    # bf16 MXU inputs / bf16 h with f32 accumulation -> relaxed tolerance.
    assert jnp.allclose(y, y_ref, atol=3e-2, rtol=3e-2), (
        float(jnp.max(jnp.abs(y - y_ref))))

    print("KERNEL_OK")
</pallas_src>

<mosaic_0001>
module attributes {stable_mosaic.version = 11 : i64} {
  func.func @decoder_kernel(%arg0: i32, %arg1: memref<8x32xf32, #tpu.memory_space<vmem>>, %arg2: memref<32x512xbf16, #tpu.memory_space<vmem>>, %arg3: memref<1x512xf32, #tpu.memory_space<vmem>>, %arg4: memref<512x896xbf16, #tpu.memory_space<vmem>>, %arg5: memref<1x896xf32, #tpu.memory_space<vmem>>, %arg6: memref<8x896xf32, #tpu.memory_space<vmem>>) attributes {dimension_semantics = [#tpu.dimension_semantics<parallel>], iteration_bounds = array<i64: 1>, scalar_prefetch = 0 : i64, scratch_operands = 0 : i64, tpu.core_type = #tpu.core_type<tc>, window_params = [{transform_indices = @transform_0, window_bounds = array<i64: 8, 32>}, {pipeline_mode = #tpu.pipeline_mode<synchronous>, transform_indices = @transform_1, window_bounds = array<i64: 32, 512>}, {pipeline_mode = #tpu.pipeline_mode<synchronous>, transform_indices = @transform_2, window_bounds = array<i64: 1, 512>}, {pipeline_mode = #tpu.pipeline_mode<synchronous>, transform_indices = @transform_3, window_bounds = array<i64: 512, 896>}, {pipeline_mode = #tpu.pipeline_mode<synchronous>, transform_indices = @transform_4, window_bounds = array<i64: 1, 896>}, {transform_indices = @transform_5, window_bounds = array<i64: 8, 896>}]} {
    %c0 = arith.constant 0 : index
    %c0_0 = arith.constant 0 : index
    %0 = vector.load %arg1[%c0, %c0_0] : memref<8x32xf32, #tpu.memory_space<vmem>>, vector<8x32xf32>
    %1 = arith.truncf %0 : vector<8x32xf32> to vector<8x32xbf16>
    %c0_1 = arith.constant 0 : index
    %c0_2 = arith.constant 0 : index
    %2 = vector.load %arg2[%c0_1, %c0_2] : memref<32x512xbf16, #tpu.memory_space<vmem>>, vector<32x512xbf16>
    %cst = arith.constant dense<0.000000e+00> : vector<8x512xf32>
    %3 = tpu.matmul %1, %2, %cst {dimension_numbers = #tpu.dot_dimension_numbers<[1], [0], [0], [1], [0, 0, 1, 1], [], []>} : vector<8x32xbf16>, vector<32x512xbf16>, vector<8x512xf32> -> vector<8x512xf32>
    %c0_3 = arith.constant 0 : index
    %c0_4 = arith.constant 0 : index
    %4 = vector.load %arg3[%c0_3, %c0_4] : memref<1x512xf32, #tpu.memory_space<vmem>>, vector<1x512xf32>
    %5 = vector.broadcast %4 : vector<1x512xf32> to vector<8x512xf32>
    %6 = arith.addf %3, %5 : vector<8x512xf32>
    %7 = arith.truncf %6 : vector<8x512xf32> to vector<8x512xbf16>
    %c0_5 = arith.constant 0 : index
    %c0_6 = arith.constant 0 : index
    %8 = vector.load %arg4[%c0_5, %c0_6] : memref<512x896xbf16, #tpu.memory_space<vmem>>, vector<512x896xbf16>
    %cst_7 = arith.constant dense<0.000000e+00> : vector<8x896xf32>
    %9 = tpu.matmul %7, %8, %cst_7 {dimension_numbers = #tpu.dot_dimension_numbers<[1], [0], [0], [1], [0, 0, 1, 1], [], []>} : vector<8x512xbf16>, vector<512x896xbf16>, vector<8x896xf32> -> vector<8x896xf32>
    %c0_8 = arith.constant 0 : index
    %c0_9 = arith.constant 0 : index
    %10 = vector.load %arg5[%c0_8, %c0_9] : memref<1x896xf32, #tpu.memory_space<vmem>>, vector<1x896xf32>
    %11 = vector.broadcast %10 : vector<1x896xf32> to vector<8x896xf32>
    %12 = arith.addf %9, %11 : vector<8x896xf32>
    %c0_10 = arith.constant 0 : index
    %c0_11 = arith.constant 0 : index
    %13 = vector.load %arg6[%c0_10, %c0_11] : memref<8x896xf32, #tpu.memory_space<vmem>>, vector<8x896xf32>
    tpu.vector_store %arg6[%c0_10, %c0_11], %12 {strides = array<i32>} : memref<8x896xf32, #tpu.memory_space<vmem>>, vector<8x896xf32>,
    return
  }
  func.func @transform_0(%arg0: i32) -> (i32, i32) {
    %c0_i32 = arith.constant 0 : i32
    %c0_i32_0 = arith.constant 0 : i32
    return %arg0, %c0_i32 : i32, i32
  }
  func.func @transform_1(%arg0: i32) -> (i32, i32) {
    %c0_i32 = arith.constant 0 : i32
    %c0_i32_0 = arith.constant 0 : i32
    %c0_i32_1 = arith.constant 0 : i32
    return %c0_i32, %c0_i32_0 : i32, i32
  }
  func.func @transform_2(%arg0: i32) -> (i32, i32) {
    %c0_i32 = arith.constant 0 : i32
    %c0_i32_0 = arith.constant 0 : i32
    %c0_i32_1 = arith.constant 0 : i32
    return %c0_i32, %c0_i32_0 : i32, i32
  }
  func.func @transform_3(%arg0: i32) -> (i32, i32) {
    %c0_i32 = arith.constant 0 : i32
    %c0_i32_0 = arith.constant 0 : i32
    %c0_i32_1 = arith.constant 0 : i32
    return %c0_i32, %c0_i32_0 : i32, i32
  }
  func.func @transform_4(%arg0: i32) -> (i32, i32) {
    %c0_i32 = arith.constant 0 : i32
    %c0_i32_0 = arith.constant 0 : i32
    %c0_i32_1 = arith.constant 0 : i32
    return %c0_i32, %c0_i32_0 : i32, i32
  }
  func.func @transform_5(%arg0: i32) -> (i32, i32) {
    %c0_i32 = arith.constant 0 : i32
    %c0_i32_0 = arith.constant 0 : i32
    return %arg0, %c0_i32 : i32, i32
  }
}

</mosaic_0001>

<llo_original>
// kernel: decoder_forward.1
$region0: #{decoder_forward.1}
  #allocation0 [shape = 'u32[]', space=smem, size = 0x4, offset = 0x4, fixed_abs, tag = 'smem constant byte address 0x4 - core index']
  #allocation1 [shape = 'u32[144,128]{1,0:T(1,128)}', space=vmem, size = 0x12000, scoped, tag = 'internal scratch']
  %s0 = inlined_call_operand.hbm [shape: f32[8,32], index: 0, kind: input, shape index: {}]
  %s1 = inlined_call_operand.hbm [shape: bf16[32,512], index: 1, kind: input, shape index: {}]
  %s2 = inlined_call_operand.vmem [shape: f32[1,512], index: 2, kind: input, shape index: {}]
  %s3 = inlined_call_operand.hbm [shape: bf16[512,896], index: 3, kind: input, shape index: {}]
  %s4 = inlined_call_operand.vmem [shape: f32[1,896], index: 4, kind: input, shape index: {}]
  %s5 = inlined_call_operand.hbm [shape: f32[8,896], index: 5, kind: output, shape index: {}]
  %s6 = sld [smem:[#allocation0]]
  $region42: #{decoder_forward.1} parent=0
    _
  %s8 = ssub.s32 1, %s6
  %s9 = scalar_select 0, %s8, %s6
  $region1: #{decoder_forward.1} parent=0
    #allocation2 [shape = 'u8[4096]{0}', space=vmem, size = 0x1000, scoped, tag = 'input window, operand 0, single buffered']
    #allocation3 [shape = 's32[1]{0}', space=sflag, size = 0x4, scoped, tag = 'scoped memory for decoder_forward.1']
    #allocation4 [shape = 's32[1]{0}', space=sflag, size = 0x4, scoped, tag = 'scoped memory for decoder_forward.1']
    #allocation5 [shape = 'u8[32768]{0}', space=vmem, size = 0x8000, scoped, tag = 'input window, operand 1, single buffered']
    #allocation6 [shape = 's32[1]{0}', space=sflag, size = 0x4, scoped, tag = 'scoped memory for decoder_forward.1']
    #allocation7 [shape = 'u8[917504]{0}', space=vmem, size = 0xe0000, scoped, tag = 'input window, operand 3, single buffered']
    #allocation8 [shape = 'u8[28672]{0}', space=vmem, size = 0x7000, scoped, tag = 'output window, operand 0, single buffered']
    %10 = vsyncpa [#allocation3], 0
    %11 = vsyncpa [#allocation6], 0
    %12 = vsyncpa [#allocation4], 0
    // Predicated region
    $region2: #{decoder_forward.1} parent=1 // pred_check
      _
    $region3: #{decoder_forward.1} parent=1 // pred_check_branch
      %14 = sbr.rel (0) target = $region5
    $region4: #{decoder_forward.1} parent=1 // pred_region
      %s16 = ssub.s32 128, 128
      %17 = vsyncadd [#allocation3], %s16
      %s19 = sshll.u32 [#allocation2], 4
      %s20 = int_to_ptr.vmem [resolvable:$true] %s19
      %22 = dma.hbm_to_vmem [thread:$0]  %s0, 128, %s20, [#allocation3]
    $region5: #{decoder_forward.1} parent=1 // pred_fallthru
      _
    // Predicated region
    $region6: #{decoder_forward.1} parent=1 // pred_check
      _
    $region7: #{decoder_forward.1} parent=1 // pred_check_branch
      %24 = sbr.rel (0) target = $region9
    $region8: #{decoder_forward.1} parent=1 // pred_region
      %s26 = ssub.s32 1024, 1024
      %27 = vsyncadd [#allocation6], %s26
      %s28 = sshll.u32 [#allocation5], 4
      %s29 = int_to_ptr.vmem [resolvable:$true] %s28
      %34 = dma.hbm_to_vmem [thread:$0]  %s1, 1024, %s29, [#allocation6], 256, 256, 16
    $region9: #{decoder_forward.1} parent=1 // pred_fallthru
      _
    // Predicated region
    $region10: #{decoder_forward.1} parent=1 // pred_check
      _
    $region11: #{decoder_forward.1} parent=1 // pred_check_branch
      %36 = sbr.rel (0) target = $region13
    $region12: #{decoder_forward.1} parent=1 // pred_region
      _
    $region13: #{decoder_forward.1} parent=1 // pred_fallthru
      _
    // Predicated region
    $region14: #{decoder_forward.1} parent=1 // pred_check
      _
    $region15: #{decoder_forward.1} parent=1 // pred_check_branch
      %38 = sbr.rel (0) target = $region17
    $region16: #{decoder_forward.1} parent=1 // pred_region
      %s40 = ssub.s32 28672, 28672
      %41 = vsyncadd [#allocation6], %s40
      %s42 = sshll.u32 [#allocation7], 4
      %s43 = int_to_ptr.vmem [resolvable:$true] %s42
      %48 = dma.hbm_to_vmem [thread:$0]  %s3, 28672, %s43, [#allocation6], 448, 448, 28
    $region17: #{decoder_forward.1} parent=1 // pred_fallthru
      _
    // Predicated region
    $region18: #{decoder_forward.1} parent=1 // pred_check
      _
    $region19: #{decoder_forward.1} parent=1 // pred_check_branch
      %50 = sbr.rel (0) target = $region21
    $region20: #{decoder_forward.1} parent=1 // pred_region
      _
    $region21: #{decoder_forward.1} parent=1 // pred_fallthru
      _
    // Predicated region
    $region22: #{decoder_forward.1} parent=1 // pred_check
      _
    $region23: #{decoder_forward.1} parent=1 // pred_check_branch
      %52 = sbr.rel (0) target = $region25
    $region24: #{decoder_forward.1} parent=1 // pred_region
      %53 = dma.done [#allocation3], 128
    $region25: #{decoder_forward.1} parent=1 // pred_fallthru
      _
    // Predicated region
    $region26: #{decoder_forward.1} parent=1 // pred_check
      _
    $region27: #{decoder_forward.1} parent=1 // pred_check_branch
      %55 = sbr.rel (0) target = $region29
    $region28: #{decoder_forward.1} parent=1 // pred_region
      %56 = dma.done [#allocation6], 1024
    $region29: #{decoder_forward.1} parent=1 // pred_fallthru
      _
    // Predicated region
    $region30: #{decoder_forward.1} parent=1 // pred_check
      _
    $region31: #{decoder_forward.1} parent=1 // pred_check_branch
      %58 = sbr.rel (0) target = $region33
    $region32: #{decoder_forward.1} parent=1 // pred_region
      %59 = dma.done [#allocation6], 28672
    $region33: #{decoder_forward.1} parent=1 // pred_fallthru
      _
    %v61 = vld [vmem:[#allocation2] sm:$0xff]
    %v62 = vpack.c.bf16 %v61, %v61
    %v63 = vld [vmem:[#allocation5] sm:$0xff]
    %v64 = vld [vmem:[#allocation5 + $0x8] sm:$0xff]
    %v65 = vld [vmem:[#allocation5 + $0x10] sm:$0xff]
    %v66 = vld [vmem:[#allocation5 + $0x18] sm:$0xff]
    %v67 = vld [vmem:[#allocation5 + $0x20] sm:$0xff]
    %v68 = vld [vmem:[#allocation5 + $0x28] sm:$0xff]
    %v69 = vld [vmem:[#allocation5 + $0x30] sm:$0xff]
    %v70 = vld [vmem:[#allocation5 + $0x38] sm:$0xff]
    %v71 = vld [vmem:[%s2] sm:$0xf]
    %v73 = vlaneseq
    %v74 = vshrl.u32 %v73, 7
    %v75 = vsub.s32 0, %v74
    %v76 = vrot.slane %v71, %v75
    %v77 = vlaneseq
    %v78 = vshrl.u32 %v77, 7
    %v79 = vsub.s32 1, %v78
    %v80 = vrot.slane %v71, %v79
    %v81 = vlaneseq
    %v82 = vshrl.u32 %v81, 7
    %v83 = vsub.s32 2, %v82
    %v84 = vrot.slane %v71, %v83
    %v85 = vlaneseq
    %v86 = vshrl.u32 %v85, 7
    %v87 = vsub.s32 3, %v86
    %v88 = vrot.slane %v71, %v87
    %v101 = vunpack.c.l.b16 %v63
    %v102 = vunpack.c.h.b16 %v63
    %v103 = vunpack.c.l.b16 %v64
    %v104 = vunpack.c.h.b16 %v64
    %v105 = vunpack.c.l.b16 %v65
    %v106 = vunpack.c.h.b16 %v65
    %v107 = vunpack.c.l.b16 %v66
    %v108 = vunpack.c.h.b16 %v66
    %v109 = vunpack.c.l.b16 %v67
    %v110 = vunpack.c.h.b16 %v67
    %v111 = vunpack.c.l.b16 %v68
    %v112 = vunpack.c.h.b16 %v68
    %v113 = vunpack.c.l.b16 %v69
    %v114 = vunpack.c.h.b16 %v69
    %v115 = vunpack.c.l.b16 %v70
    %v116 = vunpack.c.h.b16 %v70
    %v117 = vpack.c.b16 %v105, %v101
    %v118 = vpack.c.b16 %v106, %v102
    %v119 = vpack.c.b16 %v107, %v103
    %v120 = vpack.c.b16 %v108, %v104
    %v121 = vpack.c.b16 %v113, %v109
    %v122 = vpack.c.b16 %v114, %v110
    %v123 = vpack.c.b16 %v115, %v111
    %v124 = vpack.c.b16 %v116, %v112
    %vm133 = vcmask 261120
    %v135 = vsel %vm133, %v62, 0
    %137 = vmatprep.subr.bf16.mxu0 %v118
    %138 = vmatpush1.bf16.msra.mxu0 %v117
    %139 = vmatprep.subr.bf16.mxu0 %v122
    %140 = vmatpush1.bf16.msra.mxu0 %v121
    %141 = vmatprep.subr.bf16.mxu0 0
    %142 = vmatpush1.bf16.msra.mxu0 0
    %143 = vmatprep.subr.bf16.mxu0 0
    %144 = vmatpush1.bf16.msra.mxu0 0
    %145 = vmatprep.subr.bf16.mxu0 0
    %146 = vmatpush1.bf16.msra.mxu0 0
    %147 = vmatprep.subr.bf16.mxu0 0
    %148 = vmatpush1.bf16.msra.mxu0 0
    %149 = vmatprep.subr.bf16.mxu0 0
    %150 = vmatpush1.bf16.msra.mxu0 0
    %151 = vmatprep.subr.bf16.mxu0 0
    %152 = vmatpush1.bf16.msra.mxu0 0
    %153 = vmatprep.subr.bf16.mxu0 0
    %154 = vmatpush1.bf16.msra.mxu0 0
    %155 = vmatprep.subr.bf16.mxu0 0
    %156 = vmatpush1.bf16.msra.mxu0 0
    %157 = vmatprep.subr.bf16.mxu0 0
    %158 = vmatpush1.bf16.msra.mxu0 0
    %159 = vmatprep.subr.bf16.mxu0 0
    %160 = vmatpush1.bf16.msra.mxu0 0
    %161 = vmatprep.subr.bf16.mxu0 0
    %162 = vmatpush1.bf16.msra.mxu0 0
    %163 = vmatprep.subr.bf16.mxu0 0
    %164 = vmatpush1.bf16.msra.mxu0 0
    %165 = vmatprep.subr.bf16.mxu0 0
    %166 = vmatpush1.bf16.msra.mxu0 0
    %167 = vmatprep.subr.bf16.mxu0 0
    %168 = vmatpush1.bf16.msra.mxu0 0
    %169 = vmatprep.mubr.bf16.mxu0 0
    %170 = vmatmul.mubr.bf16.gmra.mrb[0].mxu0 %v135
    %v171 = vpop.f32.mrb[0].mxu0
    %v172 = vadd.f32 %v76, %v171
    %v173 = vpop.f32.mrb[0].mxu0
    %v174 = vadd.f32 %v80, %v173
    %v175 = vpop.f32.mrb[0].mxu0
    %v176 = vpop.f32.mrb[0].mxu0
    %177 = vdwg.mxu0
    %178 = vmatprep.subr.bf16.mxu0 %v120
    %179 = vmatpush1.bf16.msra.mxu0 %v119
    %180 = vmatprep.subr.bf16.mxu0 %v124
    %181 = vmatpush1.bf16.msra.mxu0 %v123
    %182 = vmatprep.subr.bf16.mxu0 0
    %183 = vmatpush1.bf16.msra.mxu0 0
    %184 = vmatprep.subr.bf16.mxu0 0
    %185 = vmatpush1.bf16.msra.mxu0 0
    %186 = vmatprep.subr.bf16.mxu0 0
    %187 = vmatpush1.bf16.msra.mxu0 0
    %188 = vmatprep.subr.bf16.mxu0 0
    %189 = vmatpush1.bf16.msra.mxu0 0
    %190 = vmatprep.subr.bf16.mxu0 0
    %191 = vmatpush1.bf16.msra.mxu0 0
    %192 = vmatprep.subr.bf16.mxu0 0
    %193 = vmatpush1.bf16.msra.mxu0 0
    %194 = vmatprep.subr.bf16.mxu0 0
    %195 = vmatpush1.bf16.msra.mxu0 0
    %196 = vmatprep.subr.bf16.mxu0 0
    %197 = vmatpush1.bf16.msra.mxu0 0
    %198 = vmatprep.subr.bf16.mxu0 0
    %199 = vmatpush1.bf16.msra.mxu0 0
    %200 = vmatprep.subr.bf16.mxu0 0
    %201 = vmatpush1.bf16.msra.mxu0 0
    %202 = vmatprep.subr.bf16.mxu0 0
    %203 = vmatpush1.bf16.msra.mxu0 0
    %204 = vmatprep.subr.bf16.mxu0 0
    %205 = vmatpush1.bf16.msra.mxu0 0
    %206 = vmatprep.subr.bf16.mxu0 0
    %207 = vmatpush1.bf16.msra.mxu0 0
    %208 = vmatprep.subr.bf16.mxu0 0
    %209 = vmatpush1.bf16.msra.mxu0 0
    %210 = vmatprep.mubr.bf16.mxu0 0
    %211 = vmatmul.mubr.bf16.gmra.mrb[0].mxu0 %v135
    %v212 = vpop.f32.mrb[0].mxu0
    %v213 = vadd.f32 %v84, %v212
    %v214 = vpop.f32.mrb[0].mxu0
    %v215 = vadd.f32 %v88, %v214
    %v216 = vpop.f32.mrb[0].mxu0
    %v217 = vpop.f32.mrb[0].mxu0
    %218 = vdwg.mxu0
    %v219 = vpack.c.bf16 %v172, %v172
    %v220 = vpack.c.bf16 %v174, %v174
    %v221 = vpack.c.bf16 %v213, %v213
    %v222 = vpack.c.bf16 %v215, %v215
    %v223 = vld [vmem:[#allocation7] sm:$0xff]
    %v224 = vld [vmem:[#allocation7 + $0x8] sm:$0xff]
    %v225 = vld [vmem:[#allocation7 + $0x10] sm:$0xff]
    %v226 = vld [vmem:[#allocation7 + $0x18] sm:$0xf]
    %v227 = vld [vmem:[#allocation7 + $0x1c] sm:$0xff]
    %v228 = vld [vmem:[#allocation7 + $0x24] sm:$0xff]
    %v229 = vld [vmem:[#allocation7 + $0x2c] sm:$0xff]
    %v230 = vld [vmem:[#allocation7 + $0x34] sm:$0xf]
    %v231 = vld [vmem:[#allocation7 + $0x38] sm:$0xff]
    %v232 = vld [vmem:[#allocation7 + $0x40] sm:$0xff]
    %v233 = vld [vmem:[#allocation7 + $0x48] sm:$0xff]
    %v234 = vld [vmem:[#allocation7 + $0x50] sm:$0xf]
    %v235 = vld [vmem:[#allocation7 + $0x54] sm:$0xff]
    %v236 = vld [vmem:[#allocation7 + $0x5c] sm:$0xff]
    %v237 = vld [vmem:[#allocation7 + $0x64] sm:$0xff]
    %v238 = vld [vmem:[#allocation7 + $0x6c] sm:$0xf]
    %v239 = vld [vmem:[#allocation7 + $0x70] sm:$0xff]
    %v240 = vld [vmem:[#allocation7 + $0x78] sm:$0xff]
    %v241 = vld [vmem:[#allocation7 + $0x80] sm:$0xff]
    %v242 = vld [vmem:[#allocation7 + $0x88] sm:$0xf]
    %v243 = vld [vmem:[#allocation7 + $0x8c] sm:$0xff]
    %v244 = vld [vmem:[#allocation7 + $0x94] sm:$0xff]
    %v245 = vld [vmem:[#allocation7 + $0x9c] sm:$0xff]
    %v246 = vld [vmem:[#allocation7 + $0xa4] sm:$0xf]
    %v247 = vld [vmem:[#allocation7 + $0xa8] sm:$0xff]
    %v248 = vld [vmem:[#allocation7 + $0xb0] sm:$0xff]
    %v249 = vld [vmem:[#allocation7 + $0xb8] sm:$0xff]
    %v250 = vld [vmem:[#allocation7 + $0xc0] sm:$0xf]
    %v251 = vld [vmem:[#allocation7 + $0xc4] sm:$0xff]
    %v252 = vld [vmem:[#allocation7 + $0xcc] sm:$0xff]
    %v253 = vld [vmem:[#allocation7 + $0xd4] sm:$0xff]
    %v254 = vld [vmem:[#allocation7 + $0xdc] sm:$0xf]
    %v255 = vld [vmem:[#allocation7 + $0xe0] sm:$0xff]
    %v256 = vld [vmem:[#allocation7 + $0xe8] sm:$0xff]
    %v257 = vld [vmem:[#allocation7 + $0xf0] sm:$0xff]
    %v258 = vld [vmem:[#allocation7 + $0xf8] sm:$0xf]
    %v259 = vld [vmem:[#allocation7 + $0xfc] sm:$0xff]
    %v260 = vld [vmem:[#allocation7 + $0x104] sm:$0xff]
    %v261 = vld [vmem:[#allocation7 + $0x10c] sm:$0xff]
    %v262 = vld [vmem:[#allocation7 + $0x114] sm:$0xf]
    %v263 = vld [vmem:[#allocation7 + $0x118] sm:$0xff]
    %v264 = vld [vmem:[#allocation7 + $0x120] sm:$0xff]
    %v265 = vld [vmem:[#allocation7 + $0x128] sm:$0xff]
    %v266 = vld [vmem:[#allocation7 + $0x130] sm:$0xf]
    %v267 = vld [vmem:[#allocation7 + $0x134] sm:$0xff]
    %v268 = vld [vmem:[#allocation7 + $0x13c] sm:$0xff]
    %v269 = vld [vmem:[#allocation7 + $0x144] sm:$0xff]
    %v270 = vld [vmem:[#allocation7 + $0x14c] sm:$0xf]
    %v271 = vld [vmem:[#allocation7 + $0x150] sm:$0xff]
    %v272 = vld [vmem:[#allocation7 + $0x158] sm:$0xff]
    %v273 = vld [vmem:[#allocation7 + $0x160] sm:$0xff]
    %v274 = vld [vmem:[#allocation7 + $0x168] sm:$0xf]
    %v275 = vld [vmem:[#allocation7 + $0x16c] sm:$0xff]
    %v276 = vld [vmem:[#allocation7 + $0x174] sm:$0xff]
    %v277 = vld [vmem:[#allocation7 + $0x17c] sm:$0xff]
    %v278 = vld [vmem:[#allocation7 + $0x184] sm:$0xf]
    %v279 = vld [vmem:[#allocation7 + $0x188] sm:$0xff]
    %v280 = vld [vmem:[#allocation7 + $0x190] sm:$0xff]
    %v281 = vld [vmem:[#allocation7 + $0x198] sm:$0xff]
    %v282 = vld [vmem:[#allocation7 + $0x1a0] sm:$0xf]
    %v283 = vld [vmem:[#allocation7 + $0x1a4] sm:$0xff]
    %v284 = vld [vmem:[#allocation7 + $0x1ac] sm:$0xff]
    %v285 = vld [vmem:[#allocation7 + $0x1b4] sm:$0xff]
    %v286 = vld [vmem:[#allocation7 + $0x1bc] sm:$0xf]
    %v287 = vld [vmem:[#allocation7 + $0x1c0] sm:$0xff]
    %v288 = vld [vmem:[#allocation7 + $0x1c8] sm:$0xff]
    %v289 = vld [vmem:[#allocation7 + $0x1d0] sm:$0xff]
    %v290 = vld [vmem:[#allocation7 + $0x1d8] sm:$0xf]
    %v291 = vld [vmem:[#allocation7 + $0x1dc] sm:$0xff]
    %v292 = vld [vmem:[#allocation7 + $0x1e4] sm:$0xff]
    %v293 = vld [vmem:[#allocation7 + $0x1ec] sm:$0xff]
    %v294 = vld [vmem:[#allocation7 + $0x1f4] sm:$0xf]
    %v295 = vld [vmem:[#allocation7 + $0x1f8] sm:$0xff]
    %v296 = vld [vmem:[#allocation7 + $0x200] sm:$0xff]
    %v297 = vld [vmem:[#allocation7 + $0x208] sm:$0xff]
    %v298 = vld [vmem:[#allocation7 + $0x210] sm:$0xf]
    %v299 = vld [vmem:[#allocation7 + $0x214] sm:$0xff]
    %v300 = vld [vmem:[#allocation7 + $0x21c] sm:$0xff]
    %v301 = vld [vmem:[#allocation7 + $0x224] sm:$0xff]
    %v302 = vld [vmem:[#allocation7 + $0x22c] sm:$0xf]
    %v303 = vld [vmem:[#allocation7 + $0x230] sm:$0xff]
    %v304 = vld [vmem:[#allocation7 + $0x238] sm:$0xff]
    %v305 = vld [vmem:[#allocation7 + $0x240] sm:$0xff]
    %v306 = vld [vmem:[#allocation7 + $0x248] sm:$0xf]
    %v307 = vld [vmem:[#allocation7 + $0x24c] sm:$0xff]
    %v308 = vld [vmem:[#allocation7 + $0x254] sm:$0xff]
    %v309 = vld [vmem:[#allocation7 + $0x25c] sm:$0xff]
    %v310 = vld [vmem:[#allocation7 + $0x264] sm:$0xf]
    %v311 = vld [vmem:[#allocation7 + $0x268] sm:$0xff]
    %v312 = vld [vmem:[#allocation7 + $0x270] sm:$0xff]
    %v313 = vld [vmem:[#allocation7 + $0x278] sm:$0xff]
    %v314 = vld [vmem:[#allocation7 + $0x280] sm:$0xf]
    %v315 = vld [vmem:[#allocation7 + $0x284] sm:$0xff]
    %v316 = vld [vmem:[#allocation7 + $0x28c] sm:$0xff]
    %v317 = vld [vmem:[#allocation7 + $0x294] sm:$0xff]
    %v318 = vld [vmem:[#allocation7 + $0x29c] sm:$0xf]
    %v319 = vld [vmem:[#allocation7 + $0x2a0] sm:$0xff]
    %v320 = vld [vmem:[#allocation7 + $0x2a8] sm:$0xff]
    %v321 = vld [vmem:[#allocation7 + $0x2b0] sm:$0xff]
    %v322 = vld [vmem:[#allocation7 + $0x2b8] sm:$0xf]
    %v323 = vld [vmem:[#allocation7 + $0x2bc] sm:$0xff]
    %v324 = vld [vmem:[#allocation7 + $0x2c4] sm:$0xff]
    %v325 = vld [vmem:[#allocation7 + $0x2cc] sm:$0xff]
    %v326 = vld [vmem:[#allocation7 + $0x2d4] sm:$0xf]
    %v327 = vld [vmem:[#allocation7 + $0x2d8] sm:$0xff]
    %v328 = vld [vmem:[#allocation7 + $0x2e0] sm:$0xff]
    %v329 = vld [vmem:[#allocation7 + $0x2e8] sm:$0xff]
    %v330 = vld [vmem:[#allocation7 + $0x2f0] sm:$0xf]
    %v331 = vld [vmem:[#allocation7 + $0x2f4] sm:$0xff]
    %v332 = vld [vmem:[#allocation7 + $0x2fc] sm:$0xff]
    %v333 = vld [vmem:[#allocation7 + $0x304] sm:$0xff]
    %v334 = vld [vmem:[#allocation7 + $0x30c] sm:$0xf]
    %v335 = vld [vmem:[#allocation7 + $0x310] sm:$0xff]
    %v336 = vld [vmem:[#allocation7 + $0x318] sm:$0xff]
    %v337 = vld [vmem:[#allocation7 + $0x320] sm:$0xff]
    %v338 = vld [vmem:[#allocation7 + $0x328] sm:$0xf]
    %v339 = vld [vmem:[#allocation7 + $0x32c] sm:$0xff]
    %v340 = vld [vmem:[#allocation7 + $0x334] sm:$0xff]
    %v341 = vld [vmem:[#allocation7 + $0x33c] sm:$0xff]
    %v342 = vld [vmem:[#allocation7 + $0x344] sm:$0xf]
    %v343 = vld [vmem:[#allocation7 + $0x348] sm:$0xff]
    %v344 = vld [vmem:[#allocation7 + $0x350] sm:$0xff]
    %v345 = vld [vmem:[#allocation7 + $0x358] sm:$0xff]
    %v346 = vld [vmem:[#allocation7 + $0x360] sm:$0xf]
    %v347 = vld [vmem:[#allocation7 + $0x364] sm:$0xff]
    %v348 = vld [vmem:[#allocation7 + $0x36c] sm:$0xff]
    %v349 = vld [vmem:[#allocation7 + $0x374] sm:$0xff]
    %v350 = vld [vmem:[#allocation7 + $0x37c] sm:$0xf]
    %v351 = vld [vmem:[#allocation7 + $0x380] sm:$0xff]
    %v352 = vld [vmem:[#allocation7 + $0x388] sm:$0xff]
    %v353 = vld [vmem:[#allocation7 + $0x390] sm:$0xff]
    %v354 = vld [vmem:[#allocation7 + $0x398] sm:$0xf]
    %v355 = vld [vmem:[#allocation7 + $0x39c] sm:$0xff]
    %v356 = vld [vmem:[#allocation7 + $0x3a4] sm:$0xff]
    %v357 = vld [vmem:[#allocation7 + $0x3ac] sm:$0xff]
    %v358 = vld [vmem:[#allocation7 + $0x3b4] sm:$0xf]
    %v359 = vld [vmem:[#allocation7 + $0x3b8] sm:$0xff]
    %v360 = vld [vmem:[#allocation7 + $0x3c0] sm:$0xff]
    %v361 = vld [vmem:[#allocation7 + $0x3c8] sm:$0xff]
    %v362 = vld [vmem:[#allocation7 + $0x3d0] sm:$0xf]
    %v363 = vld [vmem:[#allocation7 + $0x3d4] sm:$0xff]
    %v364 = vld [vmem:[#allocation7 + $0x3dc] sm:$0xff]
    %v365 = vld [vmem:[#allocation7 + $0x3e4] sm:$0xff]
    %v366 = vld [vmem:[#allocation7 + $0x3ec] sm:$0xf]
    %v367 = vld [vmem:[#allocation7 + $0x3f0] sm:$0xff]
    %v368 = vld [vmem:[#allocation7 + $0x3f8] sm:$0xff]
    %v369 = vld [vmem:[#allocation7 + $0x400] sm:$0xff]
    %v370 = vld [vmem:[#allocation7 + $0x408] sm:$0xf]
    %v371 = vld [vmem:[#allocation7 + $0x40c] sm:$0xff]
    %v372 = vld [vmem:[#allocation7 + $0x414] sm:$0xff]
    %v373 = vld [vmem:[#allocation7 + $0x41c] sm:$0xff]
    %v374 = vld [vmem:[#allocation7 + $0x424] sm:$0xf]
    %v375 = vld [vmem:[#allocation7 + $0x428] sm:$0xff]
    %v376 = vld [vmem:[#allocation7 + $0x430] sm:$0xff]
    %v377 = vld [vmem:[#allocation7 + $0x438] sm:$0xff]
    %v378 = vld [vmem:[#allocation7 + $0x440] sm:$0xf]
    %v379 = vld [vmem:[#allocation7 + $0x444] sm:$0xff]
    %v380 = vld [vmem:[#allocation7 + $0x44c] sm:$0xff]
    %v381 = vld [vmem:[#allocation7 + $0x454] sm:$0xff]
    %v382 = vld [vmem:[#allocation7 + $0x45c] sm:$0xf]
    %v383 = vld [vmem:[#allocation7 + $0x460] sm:$0xff]
    %v384 = vld [vmem:[#allocation7 + $0x468] sm:$0xff]
    %v385 = vld [vmem:[#allocation7 + $0x470] sm:$0xff]
    %v386 = vld [vmem:[#allocation7 + $0x478] sm:$0xf]
    %v387 = vld [vmem:[#allocation7 + $0x47c] sm:$0xff]
    %v388 = vld [vmem:[#allocation7 + $0x484] sm:$0xff]
    %v389 = vld [vmem:[#allocation7 + $0x48c] sm:$0xff]
    %v390 = vld [vmem:[#allocation7 + $0x494] sm:$0xf]
    %v391 = vld [vmem:[#allocation7 + $0x498] sm:$0xff]
    %v392 = vld [vmem:[#allocation7 + $0x4a0] sm:$0xff]
    %v393 = vld [vmem:[#allocation7 + $0x4a8] sm:$0xff]
    %v394 = vld [vmem:[#allocation7 + $0x4b0] sm:$0xf]
    %v395 = vld [vmem:[#allocation7 + $0x4b4] sm:$0xff]
    %v396 = vld [vmem:[#allocation7 + $0x4bc] sm:$0xff]
    %v397 = vld [vmem:[#allocation7 + $0x4c4] sm:$0xff]
    %v398 = vld [vmem:[#allocation7 + $0x4cc] sm:$0xf]
    %v399 = vld [vmem:[#allocation7 + $0x4d0] sm:$0xff]
    %v400 = vld [vmem:[#allocation7 + $0x4d8] sm:$0xff]
    %v401 = vld [vmem:[#allocation7 + $0x4e0] sm:$0xff]
    %v402 = vld [vmem:[#allocation7 + $0x4e8] sm:$0xf]
    %v403 = vld [vmem:[#allocation7 + $0x4ec] sm:$0xff]
    %v404 = vld [vmem:[#allocation7 + $0x4f4] sm:$0xff]
    %v405 = vld [vmem:[#allocation7 + $0x4fc] sm:$0xff]
    %v406 = vld [vmem:[#allocation7 + $0x504] sm:$0xf]
    %v407 = vld [vmem:[#allocation7 + $0x508] sm:$0xff]
    %v408 = vld [vmem:[#allocation7 + $0x510] sm:$0xff]
    %v409 = vld [vmem:[#allocation7 + $0x518] sm:$0xff]
    %v410 = vld [vmem:[#allocation7 + $0x520] sm:$0xf]
    %v411 = vld [vmem:[#allocation7 + $0x524] sm:$0xff]
    %v412 = vld [vmem:[#allocation7 + $0x52c] sm:$0xff]
    %v413 = vld [vmem:[#allocation7 + $0x534] sm:$0xff]
    %v414 = vld [vmem:[#allocation7 + $0x53c] sm:$0xf]
    %v415 = vld [vmem:[#allocation7 + $0x540] sm:$0xff]
    %v416 = vld [vmem:[#allocation7 + $0x548] sm:$0xff]
    %v417 = vld [vmem:[#allocation7 + $0x550] sm:$0xff]
    %v418 = vld [vmem:[#allocation7 + $0x558] sm:$0xf]
    %v419 = vld [vmem:[#allocation7 + $0x55c] sm:$0xff]
    %v420 = vld [vmem:[#allocation7 + $0x564] sm:$0xff]
    %v421 = vld [vmem:[#allocation7 + $0x56c] sm:$0xff]
    %v422 = vld [vmem:[#allocation7 + $0x574] sm:$0xf]
    %v423 = vld [vmem:[#allocation7 + $0x578] sm:$0xff]
    %v424 = vld [vmem:[#allocation7 + $0x580] sm:$0xff]
    %v425 = vld [vmem:[#allocation7 + $0x588] sm:$0xff]
    %v426 = vld [vmem:[#allocation7 + $0x590] sm:$0xf]
    %v427 = vld [vmem:[#allocation7 + $0x594] sm:$0xff]
    %v428 = vld [vmem:[#allocation7 + $0x59c] sm:$0xff]
    %v429 = vld [vmem:[#allocation7 + $0x5a4] sm:$0xff]
    %v430 = vld [vmem:[#allocation7 + $0x5ac] sm:$0xf]
    %v431 = vld [vmem:[#allocation7 + $0x5b0] sm:$0xff]
    %v432 = vld [vmem:[#allocation7 + $0x5b8] sm:$0xff]
    %v433 = vld [vmem:[#allocation7 + $0x5c0] sm:$0xff]
    %v434 = vld [vmem:[#allocation7 + $0x5c8] sm:$0xf]
    %v435 = vld [vmem:[#allocation7 + $0x5cc] sm:$0xff]
    %v436 = vld [vmem:[#allocation7 + $0x5d4] sm:$0xff]
    %v437 = vld [vmem:[#allocation7 + $0x5dc] sm:$0xff]
    %v438 = vld [vmem:[#allocation7 + $0x5e4] sm:$0xf]
    %v439 = vld [vmem:[#allocation7 + $0x5e8] sm:$0xff]
    %v440 = vld [vmem:[#allocation7 + $0x5f0] sm:$0xff]
    %v441 = vld [vmem:[#allocation7 + $0x5f8] sm:$0xff]
    %v442 = vld [vmem:[#allocation7 + $0x600] sm:$0xf]
    %v443 = vld [vmem:[#allocation7 + $0x604] sm:$0xff]
    %v444 = vld [vmem:[#allocation7 + $0x60c] sm:$0xff]
    %v445 = vld [vmem:[#allocation7 + $0x614] sm:$0xff]
    %v446 = vld [vmem:[#allocation7 + $0x61c] sm:$0xf]
    %v447 = vld [vmem:[#allocation7 + $0x620] sm:$0xff]
    %v448 = vld [vmem:[#allocation7 + $0x628] sm:$0xff]
    %v449 = vld [vmem:[#allocation7 + $0x630] sm:$0xff]
    %v450 = vld [vmem:[#allocation7 + $0x638] sm:$0xf]
    %v451 = vld [vmem:[#allocation7 + $0x63c] sm:$0xff]
    %v452 = vld [vmem:[#allocation7 + $0x644] sm:$0xff]
    %v453 = vld [vmem:[#allocation7 + $0x64c] sm:$0xff]
    %v454 = vld [vmem:[#allocation7 + $0x654] sm:$0xf]
    %v455 = vld [vmem:[#allocation7 + $0x658] sm:$0xff]
    %v456 = vld [vmem:[#allocation7 + $0x660] sm:$0xff]
    %v457 = vld [vmem:[#allocation7 + $0x668] sm:$0xff]
    %v458 = vld [vmem:[#allocation7 + $0x670] sm:$0xf]
    %v459 = vld [vmem:[#allocation7 + $0x674] sm:$0xff]
    %v460 = vld [vmem:[#allocation7 + $0x67c] sm:$0xff]
    %v461 = vld [vmem:[#allocation7 + $0x684] sm:$0xff]
    %v462 = vld [vmem:[#allocation7 + $0x68c] sm:$0xf]
    %v463 = vld [vmem:[#allocation7 + $0x690] sm:$0xff]
    %v464 = vld [vmem:[#allocation7 + $0x698] sm:$0xff]
    %v465 = vld [vmem:[#allocation7 + $0x6a0] sm:$0xff]
    %v466 = vld [vmem:[#allocation7 + $0x6a8] sm:$0xf]
    %v467 = vld [vmem:[#allocation7 + $0x6ac] sm:$0xff]
    %v468 = vld [vmem:[#allocation7 + $0x6b4] sm:$0xff]
    %v469 = vld [vmem:[#allocation7 + $0x6bc] sm:$0xff]
    %v470 = vld [vmem:[#allocation7 + $0x6c4] sm:$0xf]
    %v471 = vld [vmem:[#allocation7 + $0x6c8] sm:$0xff]
    %v472 = vld [vmem:[#allocation7 + $0x6d0] sm:$0xff]
    %v473 = vld [vmem:[#allocation7 + $0x6d8] sm:$0xff]
    %v474 = vld [vmem:[#allocation7 + $0x6e0] sm:$0xf]
    %v475 = vld [vmem:[#allocation7 + $0x6e4] sm:$0xff]
    %v476 = vld [vmem:[#allocation7 + $0x6ec] sm:$0xff]
    %v477 = vld [vmem:[#allocation7 + $0x6f4] sm:$0xff]
    %v478 = vld [vmem:[#allocation7 + $0x6fc] sm:$0xf]
    %v479 = vld [vmem:[%s4] sm:$0xff]
    %v481 = vlaneseq
    %v482 = vshrl.u32 %v481, 7
    %v483 = vsub.s32 0, %v482
    %v484 = vrot.slane %v479, %v483
    %v485 = vlaneseq
    %v486 = vshrl.u32 %v485, 7
    %v487 = vsub.s32 1, %v486
    %v488 = vrot.slane %v479, %v487
    %v489 = vlaneseq
    %v490 = vshrl.u32 %v489, 7
    %v491 = vsub.s32 2, %v490
    %v492 = vrot.slane %v479, %v491
    %v493 = vlaneseq
    %v494 = vshrl.u32 %v493, 7
    %v495 = vsub.s32 3, %v494
    %v496 = vrot.slane %v479, %v495
    %v497 = vlaneseq
    %v498 = vshrl.u32 %v497, 7
    %v499 = vsub.s32 4, %v498
    %v500 = vrot.slane %v479, %v499
    %v501 = vlaneseq
    %v502 = vshrl.u32 %v501, 7
    %v503 = vsub.s32 5, %v502
    %v504 = vrot.slane %v479, %v503
    %v505 = vlaneseq
    %v506 = vshrl.u32 %v505, 7
    %v507 = vsub.s32 6, %v506
    %v508 = vrot.slane %v479, %v507
    %v772 = vunpack.c.l.b16 %v223
    %v773 = vunpack.c.h.b16 %v223
    %v774 = vunpack.c.l.b16 %v224
    %v775 = vunpack.c.h.b16 %v224
    %v776 = vunpack.c.l.b16 %v225
    %v777 = vunpack.c.h.b16 %v225
    %v778 = vunpack.c.l.b16 %v226
    %v779 = vunpack.c.l.b16 %v227
    %v780 = vunpack.c.h.b16 %v227
    %v781 = vunpack.c.l.b16 %v228
    %v782 = vunpack.c.h.b16 %v228
    %v783 = vunpack.c.l.b16 %v229
    %v784 = vunpack.c.h.b16 %v229
    %v785 = vunpack.c.l.b16 %v230
    %v786 = vunpack.c.l.b16 %v231
    %v787 = vunpack.c.h.b16 %v231
    %v788 = vunpack.c.l.b16 %v232
    %v789 = vunpack.c.h.b16 %v232
    %v790 = vunpack.c.l.b16 %v233
    %v791 = vunpack.c.h.b16 %v233
    %v792 = vunpack.c.l.b16 %v234
    %v793 = vunpack.c.l.b16 %v235
    %v794 = vunpack.c.h.b16 %v235
    %v795 = vunpack.c.l.b16 %v236
    %v796 = vunpack.c.h.b16 %v236
    %v797 = vunpack.c.l.b16 %v237
    %v798 = vunpack.c.h.b16 %v237
    %v799 = vunpack.c.l.b16 %v238
    %v800 = vunpack.c.l.b16 %v239
    %v801 = vunpack.c.h.b16 %v239
    %v802 = vunpack.c.l.b16 %v240
    %v803 = vunpack.c.h.b16 %v240
    %v804 = vunpack.c.l.b16 %v241
    %v805 = vunpack.c.h.b16 %v241
    %v806 = vunpack.c.l.b16 %v242
    %v807 = vunpack.c.l.b16 %v243
    %v808 = vunpack.c.h.b16 %v243
    %v809 = vunpack.c.l.b16 %v244
    %v810 = vunpack.c.h.b16 %v244
    %v811 = vunpack.c.l.b16 %v245
    %v812 = vunpack.c.h.b16 %v245
    %v813 = vunpack.c.l.b16 %v246
    %v814 = vunpack.c.l.b16 %v247
    %v815 = vunpack.c.h.b16 %v247
    %v816 = vunpack.c.l.b16 %v248
    %v817 = vunpack.c.h.b16 %v248
    %v818 = vunpack.c.l.b16 %v249
    %v819 = vunpack.c.h.b16 %v249
    %v820 = vunpack.c.l.b16 %v250
    %v821 = vunpack.c.l.b16 %v251
    %v822 = vunpack.c.h.b16 %v251
    %v823 = vunpack.c.l.b16 %v252
    %v824 = vunpack.c.h.b16 %v252
    %v825 = vunpack.c.l.b16 %v253
    %v826 = vunpack.c.h.b16 %v253
    %v827 = vunpack.c.l.b16 %v254
    %v828 = vunpack.c.l.b16 %v255
    %v829 = vunpack.c.h.b16 %v255
    %v830 = vunpack.c.l.b16 %v256
    %v831 = vunpack.c.h.b16 %v256
    %v832 = vunpack.c.l.b16 %v257
    %v833 = vunpack.c.h.b16 %v257
    %v834 = vunpack.c.l.b16 %v258
    %v835 = vunpack.c.l.b16 %v259
    %v836 = vunpack.c.h.b16 %v259
    %v837 = vunpack.c.l.b16 %v260
    %v838 = vunpack.c.h.b16 %v260
    %v839 = vunpack.c.l.b16 %v261
    %v840 = vunpack.c.h.b16 %v261
    %v841 = vunpack.c.l.b16 %v262
    %v842 = vunpack.c.l.b16 %v263
    %v843 = vunpack.c.h.b16 %v263
    %v844 = vunpack.c.l.b16 %v264
    %v845 = vunpack.c.h.b16 %v264
    %v846 = vunpack.c.l.b16 %v265
    %v847 = vunpack.c.h.b16 %v265
    %v848 = vunpack.c.l.b16 %v266
    %v849 = vunpack.c.l.b16 %v267
    %v850 = vunpack.c.h.b16 %v267
    %v851 = vunpack.c.l.b16 %v268
    %v852 = vunpack.c.h.b16 %v268
    %v853 = vunpack.c.l.b16 %v269
    %v854 = vunpack.c.h.b16 %v269
    %v855 = vunpack.c.l.b16 %v270
    %v856 = vunpack.c.l.b16 %v271
    %v857 = vunpack.c.h.b16 %v271
    %v858 = vunpack.c.l.b16 %v272
    %v859 = vunpack.c.h.b16 %v272
    %v860 = vunpack.c.l.b16 %v273
    %v861 = vunpack.c.h.b16 %v273
    %v862 = vunpack.c.l.b16 %v274
    %v863 = vunpack.c.l.b16 %v275
    %v864 = vunpack.c.h.b16 %v275
    %v865 = vunpack.c.l.b16 %v276
    %v866 = vunpack.c.h.b16 %v276
    %v867 = vunpack.c.l.b16 %v277
    %v868 = vunpack.c.h.b16 %v277
    %v869 = vunpack.c.l.b16 %v278
    %v870 = vunpack.c.l.b16 %v279
    %v871 = vunpack.c.h.b16 %v279
    %v872 = vunpack.c.l.b16 %v280
    %v873 = vunpack.c.h.b16 %v280
    %v874 = vunpack.c.l.b16 %v281
    %v875 = vunpack.c.h.b16 %v281
    %v876 = vunpack.c.l.b16 %v282
    %v877 = vunpack.c.l.b16 %v283
    %v878 = vunpack.c.h.b16 %v283
    %v879 = vunpack.c.l.b16 %v284
    %v880 = vunpack.c.h.b16 %v284
    %v881 = vunpack.c.l.b16 %v285
    %v882 = vunpack.c.h.b16 %v285
    %v883 = vunpack.c.l.b16 %v286
    %v884 = vunpack.c.l.b16 %v287
    %v885 = vunpack.c.h.b16 %v287
    %v886 = vunpack.c.l.b16 %v288
    %v887 = vunpack.c.h.b16 %v288
    %v888 = vunpack.c.l.b16 %v289
    %v889 = vunpack.c.h.b16 %v289
    %v890 = vunpack.c.l.b16 %v290
    %v891 = vunpack.c.l.b16 %v291
    %v892 = vunpack.c.h.b16 %v291
    %v893 = vunpack.c.l.b16 %v292
    %v894 = vunpack.c.h.b16 %v292
    %v895 = vunpack.c.l.b16 %v293
    %v896 = vunpack.c.h.b16 %v293
    %v897 = vunpack.c.l.b16 %v294
    %v898 = vunpack.c.l.b16 %v295
    %v899 = vunpack.c.h.b16 %v295
    %v900 = vunpack.c.l.b16 %v296
    %v901 = vunpack.c.h.b16 %v296
    %v902 = vunpack.c.l.b16 %v297
    %v903 = vunpack.c.h.b16 %v297
    %v904 = vunpack.c.l.b16 %v298
    %v905 = vunpack.c.l.b16 %v299
    %v906 = vunpack.c.h.b16 %v299
    %v907 = vunpack.c.l.b16 %v300
    %v908 = vunpack.c.h.b16 %v300
    %v909 = vunpack.c.l.b16 %v301
    %v910 = vunpack.c.h.b16 %v301
    %v911 = vunpack.c.l.b16 %v302
    %v912 = vunpack.c.l.b16 %v303
    %v913 = vunpack.c.h.b16 %v303
    %v914 = vunpack.c.l.b16 %v304
    %v915 = vunpack.c.h.b16 %v304
    %v916 = vunpack.c.l.b16 %v305
    %v917 = vunpack.c.h.b16 %v305
    %v918 = vunpack.c.l.b16 %v306
    %v919 = vunpack.c.l.b16 %v307
    %v920 = vunpack.c.h.b16 %v307
    %v921 = vunpack.c.l.b16 %v308
    %v922 = vunpack.c.h.b16 %v308
    %v923 = vunpack.c.l.b16 %v309
    %v924 = vunpack.c.h.b16 %v309
    %v925 = vunpack.c.l.b16 %v310
    %v926 = vunpack.c.l.b16 %v311
    %v927 = vunpack.c.h.b16 %v311
    %v928 = vunpack.c.l.b16 %v312
    %v929 = vunpack.c.h.b16 %v312
    %v930 = vunpack.c.l.b16 %v313
    %v931 = vunpack.c.h.b16 %v313
    %v932 = vunpack.c.l.b16 %v314
    %v933 = vunpack.c.l.b16 %v315
    %v934 = vunpack.c.h.b16 %v315
    %v935 = vunpack.c.l.b16 %v316
    %v936 = vunpack.c.h.b16 %v316
    %v937 = vunpack.c.l.b16 %v317
    %v938 = vunpack.c.h.b16 %v317
    %v939 = vunpack.c.l.b16 %v318
    %v940 = vunpack.c.l.b16 %v319
    %v941 = vunpack.c.h.b16 %v319
    %v942 = vunpack.c.l.b16 %v320
    %v943 = vunpack.c.h.b16 %v320
    %v944 = vunpack.c.l.b16 %v321
    %v945 = vunpack.c.h.b16 %v321
    %v946 = vunpack.c.l.b16 %v322
    %v947 = vunpack.c.l.b16 %v323
    %v948 = vunpack.c.h.b16 %v323
    %v949 = vunpack.c.l.b16 %v324
    %v950 = vunpack.c.h.b16 %v324
    %v951 = vunpack.c.l.b16 %v325
    %v952 = vunpack.c.h.b16 %v325
    %v953 = vunpack.c.l.b16 %v326
    %v954 = vunpack.c.l.b16 %v327
    %v955 = vunpack.c.h.b16 %v327
    %v956 = vunpack.c.l.b16 %v328
    %v957 = vunpack.c.h.b16 %v328
    %v958 = vunpack.c.l.b16 %v329
    %v959 = vunpack.c.h.b16 %v329
    %v960 = vunpack.c.l.b16 %v330
    %v961 = vunpack.c.l.b16 %v331
    %v962 = vunpack.c.h.b16 %v331
    %v963 = vunpack.c.l.b16 %v332
    %v964 = vunpack.c.h.b16 %v332
    %v965 = vunpack.c.l.b16 %v333
    %v966 = vunpack.c.h.b16 %v333
    %v967 = vunpack.c.l.b16 %v334
    %v968 = vunpack.c.l.b16 %v335
    %v969 = vunpack.c.h.b16 %v335
    %v970 = vunpack.c.l.b16 %v336
    %v971 = vunpack.c.h.b16 %v336
    %v972 = vunpack.c.l.b16 %v337
    %v973 = vunpack.c.h.b16 %v337
    %v974 = vunpack.c.l.b16 %v338
    %v975 = vunpack.c.l.b16 %v339
    %v976 = vunpack.c.h.b16 %v339
    %v977 = vunpack.c.l.b16 %v340
    %v978 = vunpack.c.h.b16 %v340
    %v979 = vunpack.c.l.b16 %v341
    %v980 = vunpack.c.h.b16 %v341
    %v981 = vunpack.c.l.b16 %v342
    %v982 = vunpack.c.l.b16 %v343
    %v983 = vunpack.c.h.b16 %v343
    %v984 = vunpack.c.l.b16 %v344
    %v985 = vunpack.c.h.b16 %v344
    %v986 = vunpack.c.l.b16 %v345
    %v987 = vunpack.c.h.b16 %v345
    %v988 = vunpack.c.l.b16 %v346
    %v989 = vunpack.c.l.b16 %v347
    %v990 = vunpack.c.h.b16 %v347
    %v991 = vunpack.c.l.b16 %v348
    %v992 = vunpack.c.h.b16 %v348
    %v993 = vunpack.c.l.b16 %v349
    %v994 = vunpack.c.h.b16 %v349
    %v995 = vunpack.c.l.b16 %v350
    %v996 = vunpack.c.l.b16 %v351
    %v997 = vunpack.c.h.b16 %v351
    %v998 = vunpack.c.l.b16 %v352
    %v999 = vunpack.c.h.b16 %v352
    %v1000 = vunpack.c.l.b16 %v353
    %v1001 = vunpack.c.h.b16 %v353
    %v1002 = vunpack.c.l.b16 %v354
    %v1003 = vunpack.c.l.b16 %v355
    %v1004 = vunpack.c.h.b16 %v355
    %v1005 = vunpack.c.l.b16 %v356
    %v1006 = vunpack.c.h.b16 %v356
    %v1007 = vunpack.c.l.b16 %v357
    %v1008 = vunpack.c.h.b16 %v357
    %v1009 = vunpack.c.l.b16 %v358
    %v1010 = vunpack.c.l.b16 %v359
    %v1011 = vunpack.c.h.b16 %v359
    %v1012 = vunpack.c.l.b16 %v360
    %v1013 = vunpack.c.h.b16 %v360
    %v1014 = vunpack.c.l.b16 %v361
    %v1015 = vunpack.c.h.b16 %v361
    %v1016 = vunpack.c.l.b16 %v362
    %v1017 = vunpack.c.l.b16 %v363
    %v1018 = vunpack.c.h.b16 %v363
    %v1019 = vunpack.c.l.b16 %v364
    %v1020 = vunpack.c.h.b16 %v364
    %v1021 = vunpack.c.l.b16 %v365
    %v1022 = vunpack.c.h.b16 %v365
    %v1023 = vunpack.c.l.b16 %v366
    %v1024 = vunpack.c.l.b16 %v367
    %v1025 = vunpack.c.h.b16 %v367
    %v1026 = vunpack.c.l.b16 %v368
    %v1027 = vunpack.c.h.b16 %v368
    %v1028 = vunpack.c.l.b16 %v369
    %v1029 = vunpack.c.h.b16 %v369
    %v1030 = vunpack.c.l.b16 %v370
    %v1031 = vunpack.c.l.b16 %v371
    %v1032 = vunpack.c.h.b16 %v371
    %v1033 = vunpack.c.l.b16 %v372
    %v1034 = vunpack.c.h.b16 %v372
    %v1035 = vunpack.c.l.b16 %v373
    %v1036 = vunpack.c.h.b16 %v373
    %v1037 = vunpack.c.l.b16 %v374
    %v1038 = vunpack.c.l.b16 %v375
    %v1039 = vunpack.c.h.b16 %v375
    %v1040 = vunpack.c.l.b16 %v376
    %v1041 = vunpack.c.h.b16 %v376
    %v1042 = vunpack.c.l.b16 %v377
    %v1043 = vunpack.c.h.b16 %v377
    %v1044 = vunpack.c.l.b16 %v378
    %v1045 = vunpack.c.l.b16 %v379
    %v1046 = vunpack.c.h.b16 %v379
    %v1047 = vunpack.c.l.b16 %v380
    %v1048 = vunpack.c.h.b16 %v380
    %v1049 = vunpack.c.l.b16 %v381
    %v1050 = vunpack.c.h.b16 %v381
    %v1051 = vunpack.c.l.b16 %v382
    %v1052 = vunpack.c.l.b16 %v383
    %v1053 = vunpack.c.h.b16 %v383
    %v1054 = vunpack.c.l.b16 %v384
    %v1055 = vunpack.c.h.b16 %v384
    %v1056 = vunpack.c.l.b16 %v385
    %v1057 = vunpack.c.h.b16 %v385
    %v1058 = vunpack.c.l.b16 %v386
    %v1059 = vunpack.c.l.b16 %v387
    %v1060 = vunpack.c.h.b16 %v387
    %v1061 = vunpack.c.l.b16 %v388
    %v1062 = vunpack.c.h.b16 %v388
    %v1063 = vunpack.c.l.b16 %v389
    %v1064 = vunpack.c.h.b16 %v389
    %v1065 = vunpack.c.l.b16 %v390
    %v1066 = vunpack.c.l.b16 %v391
    %v1067 = vunpack.c.h.b16 %v391
    %v1068 = vunpack.c.l.b16 %v392
    %v1069 = vunpack.c.h.b16 %v392
    %v1070 = vunpack.c.l.b16 %v393
    %v1071 = vunpack.c.h.b16 %v393
    %v1072 = vunpack.c.l.b16 %v394
    %v1073 = vunpack.c.l.b16 %v395
    %v1074 = vunpack.c.h.b16 %v395
    %v1075 = vunpack.c.l.b16 %v396
    %v1076 = vunpack.c.h.b16 %v396
    %v1077 = vunpack.c.l.b16 %v397
    %v1078 = vunpack.c.h.b16 %v397
    %v1079 = vunpack.c.l.b16 %v398
    %v1080 = vunpack.c.l.b16 %v399
    %v1081 = vunpack.c.h.b16 %v399
    %v1082 = vunpack.c.l.b16 %v400
    %v1083 = vunpack.c.h.b16 %v400
    %v1084 = vunpack.c.l.b16 %v401
    %v1085 = vunpack.c.h.b16 %v401
    %v1086 = vunpack.c.l.b16 %v402
    %v1087 = vunpack.c.l.b16 %v403
    %v1088 = vunpack.c.h.b16 %v403
    %v1089 = vunpack.c.l.b16 %v404
    %v1090 = vunpack.c.h.b16 %v404
    %v1091 = vunpack.c.l.b16 %v405
    %v1092 = vunpack.c.h.b16 %v405
    %v1093 = vunpack.c.l.b16 %v406
    %v1094 = vunpack.c.l.b16 %v407
    %v1095 = vunpack.c.h.b16 %v407
    %v1096 = vunpack.c.l.b16 %v408
    %v1097 = vunpack.c.h.b16 %v408
    %v1098 = vunpack.c.l.b16 %v409
    %v1099 = vunpack.c.h.b16 %v409
    %v1100 = vunpack.c.l.b16 %v410
    %v1101 = vunpack.c.l.b16 %v411
    %v1102 = vunpack.c.h.b16 %v411
    %v1103 = vunpack.c.l.b16 %v412
    %v1104 = vunpack.c.h.b16 %v412
    %v1105 = vunpack.c.l.b16 %v413
    %v1106 = vunpack.c.h.b16 %v413
    %v1107 = vunpack.c.l.b16 %v414
    %v1108 = vunpack.c.l.b16 %v415
    %v1109 = vunpack.c.h.b16 %v415
    %v1110 = vunpack.c.l.b16 %v416
    %v1111 = vunpack.c.h.b16 %v416
    %v1112 = vunpack.c.l.b16 %v417
    %v1113 = vunpack.c.h.b16 %v417
    %v1114 = vunpack.c.l.b16 %v418
    %v1115 = vunpack.c.l.b16 %v419
    %v1116 = vunpack.c.h.b16 %v419
    %v1117 = vunpack.c.l.b16 %v420
    %v1118 = vunpack.c.h.b16 %v420
    %v1119 = vunpack.c.l.b16 %v421
    %v1120 = vunpack.c.h.b16 %v421
    %v1121 = vunpack.c.l.b16 %v422
    %v1122 = vunpack.c.l.b16 %v423
    %v1123 = vunpack.c.h.b16 %v423
    %v1124 = vunpack.c.l.b16 %v424
    %v1125 = vunpack.c.h.b16 %v424
    %v1126 = vunpack.c.l.b16 %v425
    %v1127 = vunpack.c.h.b16 %v425
    %v1128 = vunpack.c.l.b16 %v426
    %v1129 = vunpack.c.l.b16 %v427
    %v1130 = vunpack.c.h.b16 %v427
    %v1131 = vunpack.c.l.b16 %v428
    %v1132 = vunpack.c.h.b16 %v428
    %v1133 = vunpack.c.l.b16 %v429
    %v1134 = vunpack.c.h.b16 %v429
    %v1135 = vunpack.c.l.b16 %v430
    %v1136 = vunpack.c.l.b16 %v431
    %v1137 = vunpack.c.h.b16 %v431
    %v1138 = vunpack.c.l.b16 %v432
    %v1139 = vunpack.c.h.b16 %v432
    %v1140 = vunpack.c.l.b16 %v433
    %v1141 = vunpack.c.h.b16 %v433
    %v1142 = vunpack.c.l.b16 %v434
    %v1143 = vunpack.c.l.b16 %v435
    %v1144 = vunpack.c.h.b16 %v435
    %v1145 = vunpack.c.l.b16 %v436
    %v1146 = vunpack.c.h.b16 %v436
    %v1147 = vunpack.c.l.b16 %v437
    %v1148 = vunpack.c.h.b16 %v437
    %v1149 = vunpack.c.l.b16 %v438
    %v1150 = vunpack.c.l.b16 %v439
    %v1151 = vunpack.c.h.b16 %v439
    %v1152 = vunpack.c.l.b16 %v440
    %v1153 = vunpack.c.h.b16 %v440
    %v1154 = vunpack.c.l.b16 %v441
    %v1155 = vunpack.c.h.b16 %v441
    %v1156 = vunpack.c.l.b16 %v442
    %v1157 = vunpack.c.l.b16 %v443
    %v1158 = vunpack.c.h.b16 %v443
    %v1159 = vunpack.c.l.b16 %v444
    %v1160 = vunpack.c.h.b16 %v444
    %v1161 = vunpack.c.l.b16 %v445
    %v1162 = vunpack.c.h.b16 %v445
    %v1163 = vunpack.c.l.b16 %v446
    %v1164 = vunpack.c.l.b16 %v447
    %v1165 = vunpack.c.h.b16 %v447
    %v1166 = vunpack.c.l.b16 %v448
    %v1167 = vunpack.c.h.b16 %v448
    %v1168 = vunpack.c.l.b16 %v449
    %v1169 = vunpack.c.h.b16 %v449
    %v1170 = vunpack.c.l.b16 %v450
    %v1171 = vunpack.c.l.b16 %v451
    %v1172 = vunpack.c.h.b16 %v451
    %v1173 = vunpack.c.l.b16 %v452
    %v1174 = vunpack.c.h.b16 %v452
    %v1175 = vunpack.c.l.b16 %v453
    %v1176 = vunpack.c.h.b16 %v453
    %v1177 = vunpack.c.l.b16 %v454
    %v1178 = vunpack.c.l.b16 %v455
    %v1179 = vunpack.c.h.b16 %v455
    %v1180 = vunpack.c.l.b16 %v456
    %v1181 = vunpack.c.h.b16 %v456
    %v1182 = vunpack.c.l.b16 %v457
    %v1183 = vunpack.c.h.b16 %v457
    %v1184 = vunpack.c.l.b16 %v458
    %v1185 = vunpack.c.l.b16 %v459
    %v1186 = vunpack.c.h.b16 %v459
    %v1187 = vunpack.c.l.b16 %v460
    %v1188 = vunpack.c.h.b16 %v460
    %v1189 = vunpack.c.l.b16 %v461
    %v1190 = vunpack.c.h.b16 %v461
    %v1191 = vunpack.c.l.b16 %v462
    %v1192 = vunpack.c.l.b16 %v463
    %v1193 = vunpack.c.h.b16 %v463
    %v1194 = vunpack.c.l.b16 %v464
    %v1195 = vunpack.c.h.b16 %v464
    %v1196 = vunpack.c.l.b16 %v465
    %v1197 = vunpack.c.h.b16 %v465
    %v1198 = vunpack.c.l.b16 %v466
    %v1199 = vunpack.c.l.b16 %v467
    %v1200 = vunpack.c.h.b16 %v467
    %v1201 = vunpack.c.l.b16 %v468
    %v1202 = vunpack.c.h.b16 %v468
    %v1203 = vunpack.c.l.b16 %v469
    %v1204 = vunpack.c.h.b16 %v469
    %v1205 = vunpack.c.l.b16 %v470
    %v1206 = vunpack.c.l.b16 %v471
    %v1207 = vunpack.c.h.b16 %v471
    %v1208 = vunpack.c.l.b16 %v472
    %v1209 = vunpack.c.h.b16 %v472
    %v1210 = vunpack.c.l.b16 %v473
    %v1211 = vunpack.c.h.b16 %v473
    %v1212 = vunpack.c.l.b16 %v474
    %v1213 = vunpack.c.l.b16 %v475
    %v1214 = vunpack.c.h.b16 %v475
    %v1215 = vunpack.c.l.b16 %v476
    %v1216 = vunpack.c.h.b16 %v476
    %v1217 = vunpack.c.l.b16 %v477
    %v1218 = vunpack.c.h.b16 %v477
    %v1219 = vunpack.c.l.b16 %v478
    %v1220 = vpack.c.b16 %v779, %v772
    %v1221 = vpack.c.b16 %v780, %v773
    %v1222 = vpack.c.b16 %v781, %v774
    %v1223 = vpack.c.b16 %v782, %v775
    %v1224 = vpack.c.b16 %v783, %v776
    %v1225 = vpack.c.b16 %v784, %v777
    %v1226 = vpack.c.b16 %v785, %v778
    %v1227 = vpack.c.b16 %v793, %v786
    %v1228 = vpack.c.b16 %v794, %v787
    %v1229 = vpack.c.b16 %v795, %v788
    %v1230 = vpack.c.b16 %v796, %v789
    %v1231 = vpack.c.b16 %v797, %v790
    %v1232 = vpack.c.b16 %v798, %v791
    %v1233 = vpack.c.b16 %v799, %v792
    %v1234 = vpack.c.b16 %v807, %v800
    %v1235 = vpack.c.b16 %v808, %v801
    %v1236 = vpack.c.b16 %v809, %v802
    %v1237 = vpack.c.b16 %v810, %v803
    %v1238 = vpack.c.b16 %v811, %v804
    %v1239 = vpack.c.b16 %v812, %v805
    %v1240 = vpack.c.b16 %v813, %v806
    %v1241 = vpack.c.b16 %v821, %v814
    %v1242 = vpack.c.b16 %v822, %v815
    %v1243 = vpack.c.b16 %v823, %v816
    %v1244 = vpack.c.b16 %v824, %v817
    %v1245 = vpack.c.b16 %v825, %v818
    %v1246 = vpack.c.b16 %v826, %v819
    %v1247 = vpack.c.b16 %v827, %v820
    %v1248 = vpack.c.b16 %v835, %v828
    %v1249 = vpack.c.b16 %v836, %v829
    %v1250 = vpack.c.b16 %v837, %v830
    %v1251 = vpack.c.b16 %v838, %v831
    %v1252 = vpack.c.b16 %v839, %v832
    %v1253 = vpack.c.b16 %v840, %v833
    %v1254 = vpack.c.b16 %v841, %v834
    %v1255 = vpack.c.b16 %v849, %v842
    %v1256 = vpack.c.b16 %v850, %v843
    %v1257 = vpack.c.b16 %v851, %v844
    %v1258 = vpack.c.b16 %v852, %v845
    %v1259 = vpack.c.b16 %v853, %v846
    %v1260 = vpack.c.b16 %v854, %v847
    %v1261 = vpack.c.b16 %v855, %v848
    %v1262 = vpack.c.b16 %v863, %v856
    %v1263 = vpack.c.b16 %v864, %v857
    %v1264 = vpack.c.b16 %v865, %v858
    %v1265 = vpack.c.b16 %v866, %v859
    %v1266 = vpack.c.b16 %v867, %v860
    %v1267 = vpack.c.b16 %v868, %v861
    %v1268 = vpack.c.b16 %v869, %v862
    %v1269 = vpack.c.b16 %v877, %v870
    %v1270 = vpack.c.b16 %v878, %v871
    %v1271 = vpack.c.b16 %v879, %v872
    %v1272 = vpack.c.b16 %v880, %v873
    %v1273 = vpack.c.b16 %v881, %v874
    %v1274 = vpack.c.b16 %v882, %v875
    %v1275 = vpack.c.b16 %v883, %v876
    %v1276 = vpack.c.b16 %v891, %v884
    %v1277 = vpack.c.b16 %v892, %v885
    %v1278 = vpack.c.b16 %v893, %v886
    %v1279 = vpack.c.b16 %v894, %v887
    %v1280 = vpack.c.b16 %v895, %v888
    %v1281 = vpack.c.b16 %v896, %v889
    %v1282 = vpack.c.b16 %v897, %v890
    %v1283 = vpack.c.b16 %v905, %v898
    %v1284 = vpack.c.b16 %v906, %v899
    %v1285 = vpack.c.b16 %v907, %v900
    %v1286 = vpack.c.b16 %v908, %v901
    %v1287 = vpack.c.b16 %v909, %v902
    %v1288 = vpack.c.b16 %v910, %v903
    %v1289 = vpack.c.b16 %v911, %v904
    %v1290 = vpack.c.b16 %v919, %v912
    %v1291 = vpack.c.b16 %v920, %v913
    %v1292 = vpack.c.b16 %v921, %v914
    %v1293 = vpack.c.b16 %v922, %v915
    %v1294 = vpack.c.b16 %v923, %v916
    %v1295 = vpack.c.b16 %v924, %v917
    %v1296 = vpack.c.b16 %v925, %v918
    %v1297 = vpack.c.b16 %v933, %v926
    %v1298 = vpack.c.b16 %v934, %v927
    %v1299 = vpack.c.b16 %v935, %v928
    %v1300 = vpack.c.b16 %v936, %v929
    %v1301 = vpack.c.b16 %v937, %v930
    %v1302 = vpack.c.b16 %v938, %v931
    %v1303 = vpack.c.b16 %v939, %v932
    %v1304 = vpack.c.b16 %v947, %v940
    %v1305 = vpack.c.b16 %v948, %v941
    %v1306 = vpack.c.b16 %v949, %v942
    %v1307 = vpack.c.b16 %v950, %v943
    %v1308 = vpack.c.b16 %v951, %v944
    %v1309 = vpack.c.b16 %v952, %v945
    %v1310 = vpack.c.b16 %v953, %v946
    %v1311 = vpack.c.b16 %v961, %v954
    %v1312 = vpack.c.b16 %v962, %v955
    %v1313 = vpack.c.b16 %v963, %v956
    %v1314 = vpack.c.b16 %v964, %v957
    %v1315 = vpack.c.b16 %v965, %v958
    %v1316 = vpack.c.b16 %v966, %v959
    %v1317 = vpack.c.b16 %v967, %v960
    %v1318 = vpack.c.b16 %v975, %v968
    %v1319 = vpack.c.b16 %v976, %v969
    %v1320 = vpack.c.b16 %v977, %v970
    %v1321 = vpack.c.b16 %v978, %v971
    %v1322 = vpack.c.b16 %v979, %v972
    %v1323 = vpack.c.b16 %v980, %v973
    %v1324 = vpack.c.b16 %v981, %v974
    %v1325 = vpack.c.b16 %v989, %v982
    %v1326 = vpack.c.b16 %v990, %v983
    %v1327 = vpack.c.b16 %v991, %v984
    %v1328 = vpack.c.b16 %v992, %v985
    %v1329 = vpack.c.b16 %v993, %v986
    %v1330 = vpack.c.b16 %v994, %v987
    %v1331 = vpack.c.b16 %v995, %v988
    %v1332 = vpack.c.b16 %v1003, %v996
    %v1333 = vpack.c.b16 %v1004, %v997
    %v1334 = vpack.c.b16 %v1005, %v998
    %v1335 = vpack.c.b16 %v1006, %v999
    %v1336 = vpack.c.b16 %v1007, %v1000
    %v1337 = vpack.c.b16 %v1008, %v1001
    %v1338 = vpack.c.b16 %v1009, %v1002
    %v1339 = vpack.c.b16 %v1017, %v1010
    %v1340 = vpack.c.b16 %v1018, %v1011
    %v1341 = vpack.c.b16 %v1019, %v1012
    %v1342 = vpack.c.b16 %v1020, %v1013
    %v1343 = vpack.c.b16 %v1021, %v1014
    %v1344 = vpack.c.b16 %v1022, %v1015
    %v1345 = vpack.c.b16 %v1023, %v1016
    %v1346 = vpack.c.b16 %v1031, %v1024
    %v1347 = vpack.c.b16 %v1032, %v1025
    %v1348 = vpack.c.b16 %v1033, %v1026
    %v1349 = vpack.c.b16 %v1034, %v1027
    %v1350 = vpack.c.b16 %v1035, %v1028
    %v1351 = vpack.c.b16 %v1036, %v1029
    %v1352 = vpack.c.b16 %v1037, %v1030
    %v1353 = vpack.c.b16 %v1045, %v1038
    %v1354 = vpack.c.b16 %v1046, %v1039
    %v1355 = vpack.c.b16 %v1047, %v1040
    %v1356 = vpack.c.b16 %v1048, %v1041
    %v1357 = vpack.c.b16 %v1049, %v1042
    %v1358 = vpack.c.b16 %v1050, %v1043
    %v1359 = vpack.c.b16 %v1051, %v1044
    %v1360 = vpack.c.b16 %v1059, %v1052
    %v1361 = vpack.c.b16 %v1060, %v1053
    %v1362 = vpack.c.b16 %v1061, %v1054
    %v1363 = vpack.c.b16 %v1062, %v1055
    %v1364 = vpack.c.b16 %v1063, %v1056
    %v1365 = vpack.c.b16 %v1064, %v1057
    %v1366 = vpack.c.b16 %v1065, %v1058
    %v1367 = vpack.c.b16 %v1073, %v1066
    %v1368 = vpack.c.b16 %v1074, %v1067
    %v1369 = vpack.c.b16 %v1075, %v1068
    %v1370 = vpack.c.b16 %v1076, %v1069
    %v1371 = vpack.c.b16 %v1077, %v1070
    %v1372 = vpack.c.b16 %v1078, %v1071
    %v1373 = vpack.c.b16 %v1079, %v1072
    %v1374 = vpack.c.b16 %v1087, %v1080
    %v1375 = vpack.c.b16 %v1088, %v1081
    %v1376 = vpack.c.b16 %v1089, %v1082
    %v1377 = vpack.c.b16 %v1090, %v1083
    %v1378 = vpack.c.b16 %v1091, %v1084
    %v1379 = vpack.c.b16 %v1092, %v1085
    %v1380 = vpack.c.b16 %v1093, %v1086
    %v1381 = vpack.c.b16 %v1101, %v1094
    %v1382 = vpack.c.b16 %v1102, %v1095
    %v1383 = vpack.c.b16 %v1103, %v1096
    %v1384 = vpack.c.b16 %v1104, %v1097
    %v1385 = vpack.c.b16 %v1105, %v1098
    %v1386 = vpack.c.b16 %v1106, %v1099
    %v1387 = vpack.c.b16 %v1107, %v1100
    %v1388 = vpack.c.b16 %v1115, %v1108
    %v1389 = vpack.c.b16 %v1116, %v1109
    %v1390 = vpack.c.b16 %v1117, %v1110
    %v1391 = vpack.c.b16 %v1118, %v1111
    %v1392 = vpack.c.b16 %v1119, %v1112
    %v1393 = vpack.c.b16 %v1120, %v1113
    %v1394 = vpack.c.b16 %v1121, %v1114
    %v1395 = vpack.c.b16 %v1129, %v1122
    %v1396 = vpack.c.b16 %v1130, %v1123
    %v1397 = vpack.c.b16 %v1131, %v1124
    %v1398 = vpack.c.b16 %v1132, %v1125
    %v1399 = vpack.c.b16 %v1133, %v1126
    %v1400 = vpack.c.b16 %v1134, %v1127
    %v1401 = vpack.c.b16 %v1135, %v1128
    %v1402 = vpack.c.b16 %v1143, %v1136
    %v1403 = vpack.c.b16 %v1144, %v1137
    %v1404 = vpack.c.b16 %v1145, %v1138
    %v1405 = vpack.c.b16 %v1146, %v1139
    %v1406 = vpack.c.b16 %v1147, %v1140
    %v1407 = vpack.c.b16 %v1148, %v1141
    %v1408 = vpack.c.b16 %v1149, %v1142
    %v1409 = vpack.c.b16 %v1157, %v1150
    %v1410 = vpack.c.b16 %v1158, %v1151
    %v1411 = vpack.c.b16 %v1159, %v1152
    %v1412 = vpack.c.b16 %v1160, %v1153
    %v1413 = vpack.c.b16 %v1161, %v1154
    %v1414 = vpack.c.b16 %v1162, %v1155
    %v1415 = vpack.c.b16 %v1163, %v1156
    %v1416 = vpack.c.b16 %v1171, %v1164
    %v1417 = vpack.c.b16 %v1172, %v1165
    %v1418 = vpack.c.b16 %v1173, %v1166
    %v1419 = vpack.c.b16 %v1174, %v1167
    %v1420 = vpack.c.b16 %v1175, %v1168
    %v1421 = vpack.c.b16 %v1176, %v1169
    %v1422 = vpack.c.b16 %v1177, %v1170
    %v1423 = vpack.c.b16 %v1185, %v1178
    %v1424 = vpack.c.b16 %v1186, %v1179
    %v1425 = vpack.c.b16 %v1187, %v1180
    %v1426 = vpack.c.b16 %v1188, %v1181
    %v1427 = vpack.c.b16 %v1189, %v1182
    %v1428 = vpack.c.b16 %v1190, %v1183
    %v1429 = vpack.c.b16 %v1191, %v1184
    %v1430 = vpack.c.b16 %v1199, %v1192
    %v1431 = vpack.c.b16 %v1200, %v1193
    %v1432 = vpack.c.b16 %v1201, %v1194
    %v1433 = vpack.c.b16 %v1202, %v1195
    %v1434 = vpack.c.b16 %v1203, %v1196
    %v1435 = vpack.c.b16 %v1204, %v1197
    %v1436 = vpack.c.b16 %v1205, %v1198
    %v1437 = vpack.c.b16 %v1213, %v1206
    %v1438 = vpack.c.b16 %v1214, %v1207
    %v1439 = vpack.c.b16 %v1215, %v1208
    %v1440 = vpack.c.b16 %v1216, %v1209
    %v1441 = vpack.c.b16 %v1217, %v1210
    %v1442 = vpack.c.b16 %v1218, %v1211
    %v1443 = vpack.c.b16 %v1219, %v1212
    %1668 = vmatprep.subr.bf16.mxu0 %v1221
    %1669 = vmatpush1.bf16.msra.mxu0 %v1220
    %1670 = vmatprep.subr.bf16.mxu0 %v1228
    %1671 = vmatpush1.bf16.msra.mxu0 %v1227
    %1672 = vmatprep.subr.bf16.mxu0 %v1235
    %1673 = vmatpush1.bf16.msra.mxu0 %v1234
    %1674 = vmatprep.subr.bf16.mxu0 %v1242
    %1675 = vmatpush1.bf16.msra.mxu0 %v1241
    %1676 = vmatprep.subr.bf16.mxu0 %v1249
    %1677 = vmatpush1.bf16.msra.mxu0 %v1248
    %1678 = vmatprep.subr.bf16.mxu0 %v1256
    %1679 = vmatpush1.bf16.msra.mxu0 %v1255
    %1680 = vmatprep.subr.bf16.mxu0 %v1263
    %1681 = vmatpush1.bf16.msra.mxu0 %v1262
    %1682 = vmatprep.subr.bf16.mxu0 %v1270
    %1683 = vmatpush1.bf16.msra.mxu0 %v1269
    %1684 = vmatprep.subr.bf16.mxu0 %v1277
    %1685 = vmatpush1.bf16.msra.mxu0 %v1276
    %1686 = vmatprep.subr.bf16.mxu0 %v1284
    %1687 = vmatpush1.bf16.msra.mxu0 %v1283
    %1688 = vmatprep.subr.bf16.mxu0 %v1291
    %1689 = vmatpush1.bf16.msra.mxu0 %v1290
    %1690 = vmatprep.subr.bf16.mxu0 %v1298
    %1691 = vmatpush1.bf16.msra.mxu0 %v1297
    %1692 = vmatprep.subr.bf16.mxu0 %v1305
    %1693 = vmatpush1.bf16.msra.mxu0 %v1304
    %1694 = vmatprep.subr.bf16.mxu0 %v1312
    %1695 = vmatpush1.bf16.msra.mxu0 %v1311
    %1696 = vmatprep.subr.bf16.mxu0 %v1319
    %1697 = vmatpush1.bf16.msra.mxu0 %v1318
    %1698 = vmatprep.subr.bf16.mxu0 %v1326
    %1699 = vmatpush1.bf16.msra.mxu0 %v1325
    %1700 = vmatprep.mubr.bf16.mxu0 %v220
    %1701 = vmatmul.mubr.bf16.gmra.mrb[0].mxu0 %v219
    %v1702 = vpop.f32.mrb[0].mxu0
    %v1703 = vadd.f32 %v484, %v1702
    %v1704 = vpop.f32.mrb[0].mxu0
    %v1705 = vadd.f32 %v488, %v1704
    %v1706 = vpop.f32.mrb[0].mxu0
    %v1707 = vpop.f32.mrb[0].mxu0
    %1708 = vdwg.mxu0
    %1709 = vmatprep.subr.bf16.mxu0 %v1333
    %1710 = vmatpush1.bf16.msra.mxu0 %v1332
    %1711 = vmatprep.subr.bf16.mxu0 %v1340
    %1712 = vmatpush1.bf16.msra.mxu0 %v1339
    %1713 = vmatprep.subr.bf16.mxu0 %v1347
    %1714 = vmatpush1.bf16.msra.mxu0 %v1346
    %1715 = vmatprep.subr.bf16.mxu0 %v1354
    %1716 = vmatpush1.bf16.msra.mxu0 %v1353
    %1717 = vmatprep.subr.bf16.mxu0 %v1361
    %1718 = vmatpush1.bf16.msra.mxu0 %v1360
    %1719 = vmatprep.subr.bf16.mxu0 %v1368
    %1720 = vmatpush1.bf16.msra.mxu0 %v1367
    %1721 = vmatprep.subr.bf16.mxu0 %v1375
    %1722 = vmatpush1.bf16.msra.mxu0 %v1374
    %1723 = vmatprep.subr.bf16.mxu0 %v1382
    %1724 = vmatpush1.bf16.msra.mxu0 %v1381
    %1725 = vmatprep.subr.bf16.mxu0 %v1389
    %1726 = vmatpush1.bf16.msra.mxu0 %v1388
    %1727 = vmatprep.subr.bf16.mxu0 %v1396
    %1728 = vmatpush1.bf16.msra.mxu0 %v1395
    %1729 = vmatprep.subr.bf16.mxu0 %v1403
    %1730 = vmatpush1.bf16.msra.mxu0 %v1402
    %1731 = vmatprep.subr.bf16.mxu0 %v1410
    %1732 = vmatpush1.bf16.msra.mxu0 %v1409
    %1733 = vmatprep.subr.bf16.mxu0 %v1417
    %1734 = vmatpush1.bf16.msra.mxu0 %v1416
    %1735 = vmatprep.subr.bf16.mxu0 %v1424
    %1736 = vmatpush1.bf16.msra.mxu0 %v1423
    %1737 = vmatprep.subr.bf16.mxu0 %v1431
    %1738 = vmatpush1.bf16.msra.mxu0 %v1430
    %1739 = vmatprep.subr.bf16.mxu0 %v1438
    %1740 = vmatpush1.bf16.msra.mxu0 %v1437
    %1741 = vmatprep.mubr.bf16.mxu0 %v222
    %1742 = vmatmul.mubr.bf16.gmra.mrb[0].mxu0 %v221
    %v1743 = vpop.f32.mrb[0].mxu0
    %v1744 = vadd.f32 %v1703, %v1743
    %v1745 = vpop.f32.mrb[0].mxu0
    %v1746 = vadd.f32 %v1705, %v1745
    %v1747 = vpop.f32.mrb[0].mxu0
    %v1748 = vpop.f32.mrb[0].mxu0
    %1749 = vdwg.mxu0
    %1750 = vmatprep.subr.bf16.mxu0 %v1223
    %1751 = vmatpush1.bf16.msra.mxu0 %v1222
    %1752 = vmatprep.subr.bf16.mxu0 %v1230
    %1753 = vmatpush1.bf16.msra.mxu0 %v1229
    %1754 = vmatprep.subr.bf16.mxu0 %v1237
    %1755 = vmatpush1.bf16.msra.mxu0 %v1236
    %1756 = vmatprep.subr.bf16.mxu0 %v1244
    %1757 = vmatpush1.bf16.msra.mxu0 %v1243
    %1758 = vmatprep.subr.bf16.mxu0 %v1251
    %1759 = vmatpush1.bf16.msra.mxu0 %v1250
    %1760 = vmatprep.subr.bf16.mxu0 %v1258
    %1761 = vmatpush1.bf16.msra.mxu0 %v1257
    %1762 = vmatprep.subr.bf16.mxu0 %v1265
    %1763 = vmatpush1.bf16.msra.mxu0 %v1264
    %1764 = vmatprep.subr.bf16.mxu0 %v1272
    %1765 = vmatpush1.bf16.msra.mxu0 %v1271
    %1766 = vmatprep.subr.bf16.mxu0 %v1279
    %1767 = vmatpush1.bf16.msra.mxu0 %v1278
    %1768 = vmatprep.subr.bf16.mxu0 %v1286
    %1769 = vmatpush1.bf16.msra.mxu0 %v1285
    %1770 = vmatprep.subr.bf16.mxu0 %v1293
    %1771 = vmatpush1.bf16.msra.mxu0 %v1292
    %1772 = vmatprep.subr.bf16.mxu0 %v1300
    %1773 = vmatpush1.bf16.msra.mxu0 %v1299
    %1774 = vmatprep.subr.bf16.mxu0 %v1307
    %1775 = vmatpush1.bf16.msra.mxu0 %v1306
    %1776 = vmatprep.subr.bf16.mxu0 %v1314
    %1777 = vmatpush1.bf16.msra.mxu0 %v1313
    %1778 = vmatprep.subr.bf16.mxu0 %v1321
    %1779 = vmatpush1.bf16.msra.mxu0 %v1320
    %1780 = vmatprep.subr.bf16.mxu0 %v1328
    %1781 = vmatpush1.bf16.msra.mxu0 %v1327
    %1782 = vmatprep.mubr.bf16.mxu0 %v220
    %1783 = vmatmul.mubr.bf16.gmra.mrb[0].mxu0 %v219
    %v1784 = vpop.f32.mrb[0].mxu0
    %v1785 = vadd.f32 %v492, %v1784
    %v1786 = vpop.f32.mrb[0].mxu0
    %v1787 = vadd.f32 %v496, %v1786
    %v1788 = vpop.f32.mrb[0].mxu0
    %v1789 = vpop.f32.mrb[0].mxu0
    %1790 = vdwg.mxu0
    %1791 = vmatprep.subr.bf16.mxu0 %v1335
    %1792 = vmatpush1.bf16.msra.mxu0 %v1334
    %1793 = vmatprep.subr.bf16.mxu0 %v1342
    %1794 = vmatpush1.bf16.msra.mxu0 %v1341
    %1795 = vmatprep.subr.bf16.mxu0 %v1349
    %1796 = vmatpush1.bf16.msra.mxu0 %v1348
    %1797 = vmatprep.subr.bf16.mxu0 %v1356
    %1798 = vmatpush1.bf16.msra.mxu0 %v1355
    %1799 = vmatprep.subr.bf16.mxu0 %v1363
    %1800 = vmatpush1.bf16.msra.mxu0 %v1362
    %1801 = vmatprep.subr.bf16.mxu0 %v1370
    %1802 = vmatpush1.bf16.msra.mxu0 %v1369
    %1803 = vmatprep.subr.bf16.mxu0 %v1377
    %1804 = vmatpush1.bf16.msra.mxu0 %v1376
    %1805 = vmatprep.subr.bf16.mxu0 %v1384
    %1806 = vmatpush1.bf16.msra.mxu0 %v1383
    %1807 = vmatprep.subr.bf16.mxu0 %v1391
    %1808 = vmatpush1.bf16.msra.mxu0 %v1390
    %1809 = vmatprep.subr.bf16.mxu0 %v1398
    %1810 = vmatpush1.bf16.msra.mxu0 %v1397
    %1811 = vmatprep.subr.bf16.mxu0 %v1405
    %1812 = vmatpush1.bf16.msra.mxu0 %v1404
    %1813 = vmatprep.subr.bf16.mxu0 %v1412
    %1814 = vmatpush1.bf16.msra.mxu0 %v1411
    %1815 = vmatprep.subr.bf16.mxu0 %v1419
    %1816 = vmatpush1.bf16.msra.mxu0 %v1418
    %1817 = vmatprep.subr.bf16.mxu0 %v1426
    %1818 = vmatpush1.bf16.msra.mxu0 %v1425
    %1819 = vmatprep.subr.bf16.mxu0 %v1433
    %1820 = vmatpush1.bf16.msra.mxu0 %v1432
    %1821 = vmatprep.subr.bf16.mxu0 %v1440
    %1822 = vmatpush1.bf16.msra.mxu0 %v1439
    %1823 = vmatprep.mubr.bf16.mxu0 %v222
    %1824 = vmatmul.mubr.bf16.gmra.mrb[0].mxu0 %v221
    %v1825 = vpop.f32.mrb[0].mxu0
    %v1826 = vadd.f32 %v1785, %v1825
    %v1827 = vpop.f32.mrb[0].mxu0
    %v1828 = vadd.f32 %v1787, %v1827
    %v1829 = vpop.f32.mrb[0].mxu0
    %v1830 = vpop.f32.mrb[0].mxu0
    %1831 = vdwg.mxu0
    %1832 = vmatprep.subr.bf16.mxu0 %v1225
    %1833 = vmatpush1.bf16.msra.mxu0 %v1224
    %1834 = vmatprep.subr.bf16.mxu0 %v1232
    %1835 = vmatpush1.bf16.msra.mxu0 %v1231
    %1836 = vmatprep.subr.bf16.mxu0 %v1239
    %1837 = vmatpush1.bf16.msra.mxu0 %v1238
    %1838 = vmatprep.subr.bf16.mxu0 %v1246
    %1839 = vmatpush1.bf16.msra.mxu0 %v1245
    %1840 = vmatprep.subr.bf16.mxu0 %v1253
    %1841 = vmatpush1.bf16.msra.mxu0 %v1252
    %1842 = vmatprep.subr.bf16.mxu0 %v1260
    %1843 = vmatpush1.bf16.msra.mxu0 %v1259
    %1844 = vmatprep.subr.bf16.mxu0 %v1267
    %1845 = vmatpush1.bf16.msra.mxu0 %v1266
    %1846 = vmatprep.subr.bf16.mxu0 %v1274
    %1847 = vmatpush1.bf16.msra.mxu0 %v1273
    %1848 = vmatprep.subr.bf16.mxu0 %v1281
    %1849 = vmatpush1.bf16.msra.mxu0 %v1280
    %1850 = vmatprep.subr.bf16.mxu0 %v1288
    %1851 = vmatpush1.bf16.msra.mxu0 %v1287
    %1852 = vmatprep.subr.bf16.mxu0 %v1295
    %1853 = vmatpush1.bf16.msra.mxu0 %v1294
    %1854 = vmatprep.subr.bf16.mxu0 %v1302
    %1855 = vmatpush1.bf16.msra.mxu0 %v1301
    %1856 = vmatprep.subr.bf16.mxu0 %v1309
    %1857 = vmatpush1.bf16.msra.mxu0 %v1308
    %1858 = vmatprep.subr.bf16.mxu0 %v1316
    %1859 = vmatpush1.bf16.msra.mxu0 %v1315
    %1860 = vmatprep.subr.bf16.mxu0 %v1323
    %1861 = vmatpush1.bf16.msra.mxu0 %v1322
    %1862 = vmatprep.subr.bf16.mxu0 %v1330
    %1863 = vmatpush1.bf16.msra.mxu0 %v1329
    %1864 = vmatprep.mubr.bf16.mxu0 %v220
    %1865 = vmatmul.mubr.bf16.gmra.mrb[0].mxu0 %v219
    %v1866 = vpop.f32.mrb[0].mxu0
    %v1867 = vadd.f32 %v500, %v1866
    %v1868 = vpop.f32.mrb[0].mxu0
    %v1869 = vadd.f32 %v504, %v1868
    %v1870 = vpop.f32.mrb[0].mxu0
    %v1871 = vpop.f32.mrb[0].mxu0
    %1872 = vdwg.mxu0
    %1873 = vmatprep.subr.bf16.mxu0 %v1337
    %1874 = vmatpush1.bf16.msra.mxu0 %v1336
    %1875 = vmatprep.subr.bf16.mxu0 %v1344
    %1876 = vmatpush1.bf16.msra.mxu0 %v1343
    %1877 = vmatprep.subr.bf16.mxu0 %v1351
    %1878 = vmatpush1.bf16.msra.mxu0 %v1350
    %1879 = vmatprep.subr.bf16.mxu0 %v1358
    %1880 = vmatpush1.bf16.msra.mxu0 %v1357
    %1881 = vmatprep.subr.bf16.mxu0 %v1365
    %1882 = vmatpush1.bf16.msra.mxu0 %v1364
    %1883 = vmatprep.subr.bf16.mxu0 %v1372
    %1884 = vmatpush1.bf16.msra.mxu0 %v1371
    %1885 = vmatprep.subr.bf16.mxu0 %v1379
    %1886 = vmatpush1.bf16.msra.mxu0 %v1378
    %1887 = vmatprep.subr.bf16.mxu0 %v1386
    %1888 = vmatpush1.bf16.msra.mxu0 %v1385
    %1889 = vmatprep.subr.bf16.mxu0 %v1393
    %1890 = vmatpush1.bf16.msra.mxu0 %v1392
    %1891 = vmatprep.subr.bf16.mxu0 %v1400
    %1892 = vmatpush1.bf16.msra.mxu0 %v1399
    %1893 = vmatprep.subr.bf16.mxu0 %v1407
    %1894 = vmatpush1.bf16.msra.mxu0 %v1406
    %1895 = vmatprep.subr.bf16.mxu0 %v1414
    %1896 = vmatpush1.bf16.msra.mxu0 %v1413
    %1897 = vmatprep.subr.bf16.mxu0 %v1421
    %1898 = vmatpush1.bf16.msra.mxu0 %v1420
    %1899 = vmatprep.subr.bf16.mxu0 %v1428
    %1900 = vmatpush1.bf16.msra.mxu0 %v1427
    %1901 = vmatprep.subr.bf16.mxu0 %v1435
    %1902 = vmatpush1.bf16.msra.mxu0 %v1434
    %1903 = vmatprep.subr.bf16.mxu0 %v1442
    %1904 = vmatpush1.bf16.msra.mxu0 %v1441
    %1905 = vmatprep.mubr.bf16.mxu0 %v222
    %1906 = vmatmul.mubr.bf16.gmra.mrb[0].mxu0 %v221
    %v1907 = vpop.f32.mrb[0].mxu0
    %v1908 = vadd.f32 %v1867, %v1907
    %v1909 = vpop.f32.mrb[0].mxu0
    %v1910 = vadd.f32 %v1869, %v1909
    %v1911 = vpop.f32.mrb[0].mxu0
    %v1912 = vpop.f32.mrb[0].mxu0
    %1913 = vdwg.mxu0
    %1914 = vmatprep.subr.bf16.mxu0 0
    %1915 = vmatpush1.bf16.msra.mxu0 %v1226
    %1916 = vmatprep.subr.bf16.mxu0 0
    %1917 = vmatpush1.bf16.msra.mxu0 %v1233
    %1918 = vmatprep.subr.bf16.mxu0 0
    %1919 = vmatpush1.bf16.msra.mxu0 %v1240
    %1920 = vmatprep.subr.bf16.mxu0 0
    %1921 = vmatpush1.bf16.msra.mxu0 %v1247
    %1922 = vmatprep.subr.bf16.mxu0 0
    %1923 = vmatpush1.bf16.msra.mxu0 %v1254
    %1924 = vmatprep.subr.bf16.mxu0 0
    %1925 = vmatpush1.bf16.msra.mxu0 %v1261
    %1926 = vmatprep.subr.bf16.mxu0 0
    %1927 = vmatpush1.bf16.msra.mxu0 %v1268
    %1928 = vmatprep.subr.bf16.mxu0 0
    %1929 = vmatpush1.bf16.msra.mxu0 %v1275
    %1930 = vmatprep.subr.bf16.mxu0 0
    %1931 = vmatpush1.bf16.msra.mxu0 %v1282
    %1932 = vmatprep.subr.bf16.mxu0 0
    %1933 = vmatpush1.bf16.msra.mxu0 %v1289
    %1934 = vmatprep.subr.bf16.mxu0 0
    %1935 = vmatpush1.bf16.msra.mxu0 %v1296
    %1936 = vmatprep.subr.bf16.mxu0 0
    %1937 = vmatpush1.bf16.msra.mxu0 %v1303
    %1938 = vmatprep.subr.bf16.mxu0 0
    %1939 = vmatpush1.bf16.msra.mxu0 %v1310
    %1940 = vmatprep.subr.bf16.mxu0 0
    %1941 = vmatpush1.bf16.msra.mxu0 %v1317
    %1942 = vmatprep.subr.bf16.mxu0 0
    %1943 = vmatpush1.bf16.msra.mxu0 %v1324
    %1944 = vmatprep.subr.bf16.mxu0 0
    %1945 = vmatpush1.bf16.msra.mxu0 %v1331
    %1946 = vmatprep.mubr.bf16.mxu0 %v220
    %1947 = vmatmul.mubr.bf16.gmra.mrb[0].mxu0 %v219
    %v1948 = vpop.f32.mrb[0].mxu0
    %v1949 = vadd.f32 %v508, %v1948
    %v1950 = vpop.f32.mrb[0].mxu0
    %v1951 = vpop.f32.mrb[0].mxu0
    %v1952 = vpop.f32.mrb[0].mxu0
    %1953 = vdwg.mxu0
    %1954 = vmatprep.subr.bf16.mxu0 0
    %1955 = vmatpush1.bf16.msra.mxu0 %v1338
    %1956 = vmatprep.subr.bf16.mxu0 0
    %1957 = vmatpush1.bf16.msra.mxu0 %v1345
    %1958 = vmatprep.subr.bf16.mxu0 0
    %1959 = vmatpush1.bf16.msra.mxu0 %v1352
    %1960 = vmatprep.subr.bf16.mxu0 0
    %1961 = vmatpush1.bf16.msra.mxu0 %v1359
    %1962 = vmatprep.subr.bf16.mxu0 0
    %1963 = vmatpush1.bf16.msra.mxu0 %v1366
    %1964 = vmatprep.subr.bf16.mxu0 0
    %1965 = vmatpush1.bf16.msra.mxu0 %v1373
    %1966 = vmatprep.subr.bf16.mxu0 0
    %1967 = vmatpush1.bf16.msra.mxu0 %v1380
    %1968 = vmatprep.subr.bf16.mxu0 0
    %1969 = vmatpush1.bf16.msra.mxu0 %v1387
    %1970 = vmatprep.subr.bf16.mxu0 0
    %1971 = vmatpush1.bf16.msra.mxu0 %v1394
    %1972 = vmatprep.subr.bf16.mxu0 0
    %1973 = vmatpush1.bf16.msra.mxu0 %v1401
    %1974 = vmatprep.subr.bf16.mxu0 0
    %1975 = vmatpush1.bf16.msra.mxu0 %v1408
    %1976 = vmatprep.subr.bf16.mxu0 0
    %1977 = vmatpush1.bf16.msra.mxu0 %v1415
    %1978 = vmatprep.subr.bf16.mxu0 0
    %1979 = vmatpush1.bf16.msra.mxu0 %v1422
    %1980 = vmatprep.subr.bf16.mxu0 0
    %1981 = vmatpush1.bf16.msra.mxu0 %v1429
    %1982 = vmatprep.subr.bf16.mxu0 0
    %1983 = vmatpush1.bf16.msra.mxu0 %v1436
    %1984 = vmatprep.subr.bf16.mxu0 0
    %1985 = vmatpush1.bf16.msra.mxu0 %v1443
    %1986 = vmatprep.mubr.bf16.mxu0 %v222
    %1987 = vmatmul.mubr.bf16.gmra.mrb[0].mxu0 %v221
    %v1988 = vpop.f32.mrb[0].mxu0
    %v1989 = vadd.f32 %v1949, %v1988
    %v1990 = vpop.f32.mrb[0].mxu0
    %v1991 = vpop.f32.mrb[0].mxu0
    %v1992 = vpop.f32.mrb[0].mxu0
    %1993 = vdwg.mxu0
    %1994 = vst [vmem:[#allocation8] sm:$0xff] %v1744
    %1995 = vst [vmem:[#allocation8 + $0x8] sm:$0xff] %v1746
    %1996 = vst [vmem:[#allocation8 + $0x10] sm:$0xff] %v1826
    %1997 = vst [vmem:[#allocation8 + $0x18] sm:$0xff] %v1828
    %1998 = vst [vmem:[#allocation8 + $0x20] sm:$0xff] %v1908
    %1999 = vst [vmem:[#allocation8 + $0x28] sm:$0xff] %v1910
    %2000 = vst [vmem:[#allocation8 + $0x30] sm:$0xff] %v1989
    // Predicated region
    $region34: #{decoder_forward.1} parent=1 // pred_check
      _
    $region35: #{decoder_forward.1} parent=1 // pred_check_branch
      %2002 = sbr.rel (0) target = $region37
    $region36: #{decoder_forward.1} parent=1 // pred_region
      %s2004 = ssub.s32 896, 896
      %2005 = vsyncadd [#allocation4], %s2004
      %s2007 = sshll.u32 [#allocation8], 4
      %s2008 = int_to_ptr.vmem [resolvable:$true] %s2007
      %2010 = dma.vmem_to_hbm [thread:$0]  %s2008, 896, %s5, [#allocation4]
    $region37: #{decoder_forward.1} parent=1 // pred_fallthru
      _
    // Predicated region
    $region38: #{decoder_forward.1} parent=1 // pred_check
      _
    $region39: #{decoder_forward.1} parent=1 // pred_check_branch
      %2012 = sbr.rel (0) target = $region41
    $region40: #{decoder_forward.1} parent=1 // pred_region
      %2013 = dma.done [#allocation4], 896
    $region41: #{decoder_forward.1} parent=1 // pred_fallthru
      _
    %2014 = vsyncpa [#allocation3], 1
    %2015 = vsyncpa [#allocation6], 1
    %2016 = vsyncpa [#allocation4], 1

</llo_original>
